<compile_context>
chip_gen: v6e
topology: v6e:2x2x1
jax: 0.10.0
libtpu: 0.0.40
codegen_flags: <defaults>
</compile_context>

<pallas_src>
import jax
import jax.numpy as jnp
from jax.experimental import pallas as pl
from jax.experimental.pallas import tpu as pltpu

KH = KW = 3
PAD = 3
CIN = 2
COUT = 10


def _make_kernel(n, h, w):
    ho = h + 2 * PAD - KH + 1
    wo = w + 2 * PAD - KW + 1
    hp = h + 2 * PAD
    wp = w + 2 * PAD

    def kernel(wslab_ref, x_ref, o_ref, xp_ref):
        # wslab_ref: (CIN*KH*KW, COUT*wo) f32 VMEM — weight slab; row = tap,
        #            each scalar repeated wo times along lanes.
        # x_ref    : (n, CIN, h, w)       f32 VMEM — NCHW input, whole batch.
        # o_ref    : (n, ho, COUT*wo)     f32 VMEM — lane-dense packed output.
        # xp_ref   : (CIN, hp, wp)        f32 VMEM scratch — zero-padded planes.
        wslab = wslab_ref[...]                       # (18, COUT*wo), load once

        # Zero the padded scratch once; the halo bands stay zero for every
        # sample, only the interior is rewritten per sample below.
        xp_ref[...] = jnp.zeros_like(xp_ref)

        for b in range(n):                           # tiny static batch -> unrolled
            xp_ref[:, PAD:PAD + h, PAD:PAD + w] = x_ref[b]

            acc = jnp.zeros((ho, COUT * wo), jnp.float32)
            for ci in range(CIN):
                xch = xp_ref[ci]                     # (hp, wp), one load per channel
                for kw in range(KW):
                    # Shifted window along W, then lane-tile COUT times (XLU,
                    # otherwise idle) so one wide FMA covers all 10 channels.
                    xs = jax.lax.slice(xch, (0, kw), (hp, kw + wo))     # (hp, wo)
                    xt = jnp.concatenate([xs] * COUT, axis=-1)          # (hp, COUT*wo)
                    for kh in range(KH):
                        tap = (ci * KH + kh) * KW + kw
                        patch = jax.lax.slice(xt, (kh, 0), (kh + ho, COUT * wo))
                        acc = acc + patch * wslab[tap]
            o_ref[b] = acc                           # full-width (12, 120) store

    return kernel, ho, wo, hp, wp


@jax.jit
def conv2d_pad3(x_nchw, w_oihw):
    """Conv2d(2, 10, 3, bias=False, padding=3) forward. x: [N, Cin, H, W] f32."""
    n, cin, h, w = x_nchw.shape
    assert cin == CIN and w_oihw.shape == (COUT, CIN, KH, KW)

    kernel, ho, wo, hp, wp = _make_kernel(n, h, w)

    # (COUT, CIN, KH, KW) -> (CIN*KH*KW, COUT) in tap order, then repeat each
    # scalar wo times along lanes -> (CIN*KH*KW, COUT*wo) weight slab.
    w_slab = jnp.repeat(
        w_oihw.astype(jnp.float32).transpose(1, 2, 3, 0).reshape(CIN * KH * KW, COUT),
        wo, axis=1)

    flops = 2 * n * ho * wo * KH * KW * CIN * COUT
    bytes_accessed = 4 * (n * CIN * h * w + CIN * KH * KW * COUT * wo
                          + n * COUT * ho * wo)

    out_packed = pl.pallas_call(
        kernel,
        out_shape=jax.ShapeDtypeStruct((n, ho, COUT * wo), jnp.float32),
        grid_spec=pltpu.PrefetchScalarGridSpec(
            num_scalar_prefetch=0,
            grid=(1,),
            in_specs=[
                pl.BlockSpec((CIN * KH * KW, COUT * wo), lambda i: (0, 0)),
                pl.BlockSpec((n, CIN, h, w), lambda i: (0, 0, 0, 0)),
            ],
            out_specs=pl.BlockSpec((n, ho, COUT * wo), lambda i: (0, 0, 0)),
            scratch_shapes=[pltpu.VMEM((CIN, hp, wp), jnp.float32)],
        ),
        compiler_params=pltpu.CompilerParams(
            dimension_semantics=("arbitrary",)),
        cost_estimate=pl.CostEstimate(
            flops=flops, transcendentals=0, bytes_accessed=bytes_accessed),
    )(w_slab, x_nchw)

    # Packed (N, HO, COUT*WO) -> NCHW (N, COUT, HO, WO); tiny XLA fixup on the
    # 11 KB result outside the kernel.
    return out_packed.reshape(n, ho, COUT, wo).transpose(0, 2, 1, 3)


if __name__ == "__main__":
    key = jax.random.PRNGKey(0)
    kx, kwt = jax.random.split(key)

    # Deterministic synthetic weight, PyTorch layout (Cout, Cin, KH, KW).
    w = jax.random.normal(kwt, (COUT, CIN, KH, KW), jnp.float32) * 0.1

    # Small NCHW input consistent with the module (Cin=2).
    x = jax.random.normal(kx, (2, CIN, 8, 8), jnp.float32)

    out = jax.block_until_ready(conv2d_pad3(x, w))

    # Reference: same semantics as torch.nn.Conv2d(2,10,3,padding=3,bias=False).
    ref = jax.lax.conv_general_dilated(
        x, w, window_strides=(1, 1), padding=((PAD, PAD), (PAD, PAD)),
        dimension_numbers=("NCHW", "OIHW", "NCHW"))
    assert out.shape == ref.shape == (2, COUT, 12, 12)
    assert jnp.allclose(out, ref, atol=1e-5, rtol=1e-5)

    print("KERNEL_OK")
</pallas_src>

<mosaic_0001>
module attributes {stable_mosaic.version = 11 : i64} {
  func.func @kernel(%arg0: i32, %arg1: memref<18x120xf32, #tpu.memory_space<vmem>>, %arg2: memref<2x2x8x8xf32, #tpu.memory_space<vmem>>, %arg3: memref<2x12x120xf32, #tpu.memory_space<vmem>>, %arg4: memref<2x14x14xf32, #tpu.memory_space<vmem>>) attributes {dimension_semantics = [#tpu.dimension_semantics<arbitrary>], iteration_bounds = array<i64: 1>, scalar_prefetch = 0 : i64, scratch_operands = 1 : i64, tpu.core_type = #tpu.core_type<tc>, window_params = [{pipeline_mode = #tpu.pipeline_mode<synchronous>, transform_indices = @transform_0, window_bounds = array<i64: 18, 120>}, {pipeline_mode = #tpu.pipeline_mode<synchronous>, transform_indices = @transform_1, window_bounds = array<i64: 2, 2, 8, 8>}, {pipeline_mode = #tpu.pipeline_mode<synchronous>, transform_indices = @transform_2, window_bounds = array<i64: 2, 12, 120>}]} {
    %c0 = arith.constant 0 : index
    %c0_0 = arith.constant 0 : index
    %0 = vector.load %arg1[%c0, %c0_0] : memref<18x120xf32, #tpu.memory_space<vmem>>, vector<18x120xf32>
    %cst = arith.constant 0.000000e+00 : f32
    %1 = vector.broadcast %cst : f32 to vector<2x14x14xf32>
    %c0_1 = arith.constant 0 : index
    %c0_2 = arith.constant 0 : index
    %c0_3 = arith.constant 0 : index
    %2 = vector.load %arg4[%c0_1, %c0_2, %c0_3] : memref<2x14x14xf32, #tpu.memory_space<vmem>>, vector<2x14x14xf32>
    tpu.vector_store %arg4[%c0_1, %c0_2, %c0_3], %1 {strides = array<i32>} : memref<2x14x14xf32, #tpu.memory_space<vmem>>, vector<2x14x14xf32>,
    %c0_4 = arith.constant 0 : index
    %c0_5 = arith.constant 0 : index
    %c0_6 = arith.constant 0 : index
    %c0_7 = arith.constant 0 : index
    %3 = vector.load %arg2[%c0_4, %c0_5, %c0_6, %c0_7] : memref<2x2x8x8xf32, #tpu.memory_space<vmem>>, vector<1x2x8x8xf32>
    %4 = vector.shape_cast %3 : vector<1x2x8x8xf32> to vector<2x8x8xf32>
    %c0_8 = arith.constant 0 : index
    %c3 = arith.constant 3 : index
    %c3_9 = arith.constant 3 : index
    %5 = vector.load %arg4[%c0_8, %c3, %c3_9] : memref<2x14x14xf32, #tpu.memory_space<vmem>>, vector<2x8x8xf32>
    tpu.vector_store %arg4[%c0_8, %c3, %c3_9], %4 {strides = array<i32>} : memref<2x14x14xf32, #tpu.memory_space<vmem>>, vector<2x8x8xf32>,
    %cst_10 = arith.constant 0.000000e+00 : f32
    %6 = vector.broadcast %cst_10 : f32 to vector<12x120xf32>
    %c0_11 = arith.constant 0 : index
    %c0_12 = arith.constant 0 : index
    %c0_13 = arith.constant 0 : index
    %7 = vector.load %arg4[%c0_11, %c0_12, %c0_13] : memref<2x14x14xf32, #tpu.memory_space<vmem>>, vector<1x14x14xf32>
    %8 = vector.shape_cast %7 : vector<1x14x14xf32> to vector<14x14xf32>
    %9 = vector.extract_strided_slice %8 {offsets = [0, 0], sizes = [14, 12], strides = [1, 1]} : vector<14x14xf32> to vector<14x12xf32>
    %10 = tpu.concatenate %9, %9, %9, %9, %9, %9, %9, %9, %9, %9 in 1 : vector<14x12xf32>, vector<14x12xf32>, vector<14x12xf32>, vector<14x12xf32>, vector<14x12xf32>, vector<14x12xf32>, vector<14x12xf32>, vector<14x12xf32>, vector<14x12xf32>, vector<14x12xf32> -> vector<14x120xf32>
    %11 = vector.extract_strided_slice %10 {offsets = [0, 0], sizes = [12, 120], strides = [1, 1]} : vector<14x120xf32> to vector<12x120xf32>
    %12 = vector.extract_strided_slice %0 {offsets = [0, 0], sizes = [1, 120], strides = [1, 1]} : vector<18x120xf32> to vector<1x120xf32>
    %13 = vector.shape_cast %12 : vector<1x120xf32> to vector<120xf32>
    %14 = vector.shape_cast %13 : vector<120xf32> to vector<1x120xf32>
    %15 = vector.broadcast %14 : vector<1x120xf32> to vector<12x120xf32>
    %16 = arith.mulf %11, %15 : vector<12x120xf32>
    %17 = arith.addf %6, %16 : vector<12x120xf32>
    %18 = vector.extract_strided_slice %10 {offsets = [1, 0], sizes = [12, 120], strides = [1, 1]} : vector<14x120xf32> to vector<12x120xf32>
    %19 = vector.extract_strided_slice %0 {offsets = [3, 0], sizes = [1, 120], strides = [1, 1]} : vector<18x120xf32> to vector<1x120xf32>
    %20 = vector.shape_cast %19 : vector<1x120xf32> to vector<120xf32>
    %21 = vector.shape_cast %20 : vector<120xf32> to vector<1x120xf32>
    %22 = vector.broadcast %21 : vector<1x120xf32> to vector<12x120xf32>
    %23 = arith.mulf %18, %22 : vector<12x120xf32>
    %24 = arith.addf %17, %23 : vector<12x120xf32>
    %25 = vector.extract_strided_slice %10 {offsets = [2, 0], sizes = [12, 120], strides = [1, 1]} : vector<14x120xf32> to vector<12x120xf32>
    %26 = vector.extract_strided_slice %0 {offsets = [6, 0], sizes = [1, 120], strides = [1, 1]} : vector<18x120xf32> to vector<1x120xf32>
    %27 = vector.shape_cast %26 : vector<1x120xf32> to vector<120xf32>
    %28 = vector.shape_cast %27 : vector<120xf32> to vector<1x120xf32>
    %29 = vector.broadcast %28 : vector<1x120xf32> to vector<12x120xf32>
    %30 = arith.mulf %25, %29 : vector<12x120xf32>
    %31 = arith.addf %24, %30 : vector<12x120xf32>
    %32 = vector.extract_strided_slice %8 {offsets = [0, 1], sizes = [14, 12], strides = [1, 1]} : vector<14x14xf32> to vector<14x12xf32>
    %33 = tpu.concatenate %32, %32, %32, %32, %32, %32, %32, %32, %32, %32 in 1 : vector<14x12xf32>, vector<14x12xf32>, vector<14x12xf32>, vector<14x12xf32>, vector<14x12xf32>, vector<14x12xf32>, vector<14x12xf32>, vector<14x12xf32>, vector<14x12xf32>, vector<14x12xf32> -> vector<14x120xf32>
    %34 = vector.extract_strided_slice %33 {offsets = [0, 0], sizes = [12, 120], strides = [1, 1]} : vector<14x120xf32> to vector<12x120xf32>
    %35 = vector.extract_strided_slice %0 {offsets = [1, 0], sizes = [1, 120], strides = [1, 1]} : vector<18x120xf32> to vector<1x120xf32>
    %36 = vector.shape_cast %35 : vector<1x120xf32> to vector<120xf32>
    %37 = vector.shape_cast %36 : vector<120xf32> to vector<1x120xf32>
    %38 = vector.broadcast %37 : vector<1x120xf32> to vector<12x120xf32>
    %39 = arith.mulf %34, %38 : vector<12x120xf32>
    %40 = arith.addf %31, %39 : vector<12x120xf32>
    %41 = vector.extract_strided_slice %33 {offsets = [1, 0], sizes = [12, 120], strides = [1, 1]} : vector<14x120xf32> to vector<12x120xf32>
    %42 = vector.extract_strided_slice %0 {offsets = [4, 0], sizes = [1, 120], strides = [1, 1]} : vector<18x120xf32> to vector<1x120xf32>
    %43 = vector.shape_cast %42 : vector<1x120xf32> to vector<120xf32>
    %44 = vector.shape_cast %43 : vector<120xf32> to vector<1x120xf32>
    %45 = vector.broadcast %44 : vector<1x120xf32> to vector<12x120xf32>
    %46 = arith.mulf %41, %45 : vector<12x120xf32>
    %47 = arith.addf %40, %46 : vector<12x120xf32>
    %48 = vector.extract_strided_slice %33 {offsets = [2, 0], sizes = [12, 120], strides = [1, 1]} : vector<14x120xf32> to vector<12x120xf32>
    %49 = vector.extract_strided_slice %0 {offsets = [7, 0], sizes = [1, 120], strides = [1, 1]} : vector<18x120xf32> to vector<1x120xf32>
    %50 = vector.shape_cast %49 : vector<1x120xf32> to vector<120xf32>
    %51 = vector.shape_cast %50 : vector<120xf32> to vector<1x120xf32>
    %52 = vector.broadcast %51 : vector<1x120xf32> to vector<12x120xf32>
    %53 = arith.mulf %48, %52 : vector<12x120xf32>
    %54 = arith.addf %47, %53 : vector<12x120xf32>
    %55 = vector.extract_strided_slice %8 {offsets = [0, 2], sizes = [14, 12], strides = [1, 1]} : vector<14x14xf32> to vector<14x12xf32>
    %56 = tpu.concatenate %55, %55, %55, %55, %55, %55, %55, %55, %55, %55 in 1 : vector<14x12xf32>, vector<14x12xf32>, vector<14x12xf32>, vector<14x12xf32>, vector<14x12xf32>, vector<14x12xf32>, vector<14x12xf32>, vector<14x12xf32>, vector<14x12xf32>, vector<14x12xf32> -> vector<14x120xf32>
    %57 = vector.extract_strided_slice %56 {offsets = [0, 0], sizes = [12, 120], strides = [1, 1]} : vector<14x120xf32> to vector<12x120xf32>
    %58 = vector.extract_strided_slice %0 {offsets = [2, 0], sizes = [1, 120], strides = [1, 1]} : vector<18x120xf32> to vector<1x120xf32>
    %59 = vector.shape_cast %58 : vector<1x120xf32> to vector<120xf32>
    %60 = vector.shape_cast %59 : vector<120xf32> to vector<1x120xf32>
    %61 = vector.broadcast %60 : vector<1x120xf32> to vector<12x120xf32>
    %62 = arith.mulf %57, %61 : vector<12x120xf32>
    %63 = arith.addf %54, %62 : vector<12x120xf32>
    %64 = vector.extract_strided_slice %56 {offsets = [1, 0], sizes = [12, 120], strides = [1, 1]} : vector<14x120xf32> to vector<12x120xf32>
    %65 = vector.extract_strided_slice %0 {offsets = [5, 0], sizes = [1, 120], strides = [1, 1]} : vector<18x120xf32> to vector<1x120xf32>
    %66 = vector.shape_cast %65 : vector<1x120xf32> to vector<120xf32>
    %67 = vector.shape_cast %66 : vector<120xf32> to vector<1x120xf32>
    %68 = vector.broadcast %67 : vector<1x120xf32> to vector<12x120xf32>
    %69 = arith.mulf %64, %68 : vector<12x120xf32>
    %70 = arith.addf %63, %69 : vector<12x120xf32>
    %71 = vector.extract_strided_slice %56 {offsets = [2, 0], sizes = [12, 120], strides = [1, 1]} : vector<14x120xf32> to vector<12x120xf32>
    %72 = vector.extract_strided_slice %0 {offsets = [8, 0], sizes = [1, 120], strides = [1, 1]} : vector<18x120xf32> to vector<1x120xf32>
    %73 = vector.shape_cast %72 : vector<1x120xf32> to vector<120xf32>
    %74 = vector.shape_cast %73 : vector<120xf32> to vector<1x120xf32>
    %75 = vector.broadcast %74 : vector<1x120xf32> to vector<12x120xf32>
    %76 = arith.mulf %71, %75 : vector<12x120xf32>
    %77 = arith.addf %70, %76 : vector<12x120xf32>
    %c1 = arith.constant 1 : index
    %c0_14 = arith.constant 0 : index
    %c0_15 = arith.constant 0 : index
    %78 = vector.load %arg4[%c1, %c0_14, %c0_15] : memref<2x14x14xf32, #tpu.memory_space<vmem>>, vector<1x14x14xf32>
    %79 = vector.shape_cast %78 : vector<1x14x14xf32> to vector<14x14xf32>
    %80 = vector.extract_strided_slice %79 {offsets = [0, 0], sizes = [14, 12], strides = [1, 1]} : vector<14x14xf32> to vector<14x12xf32>
    %81 = tpu.concatenate %80, %80, %80, %80, %80, %80, %80, %80, %80, %80 in 1 : vector<14x12xf32>, vector<14x12xf32>, vector<14x12xf32>, vector<14x12xf32>, vector<14x12xf32>, vector<14x12xf32>, vector<14x12xf32>, vector<14x12xf32>, vector<14x12xf32>, vector<14x12xf32> -> vector<14x120xf32>
    %82 = vector.extract_strided_slice %81 {offsets = [0, 0], sizes = [12, 120], strides = [1, 1]} : vector<14x120xf32> to vector<12x120xf32>
    %83 = vector.extract_strided_slice %0 {offsets = [9, 0], sizes = [1, 120], strides = [1, 1]} : vector<18x120xf32> to vector<1x120xf32>
    %84 = vector.shape_cast %83 : vector<1x120xf32> to vector<120xf32>
    %85 = vector.shape_cast %84 : vector<120xf32> to vector<1x120xf32>
    %86 = vector.broadcast %85 : vector<1x120xf32> to vector<12x120xf32>
    %87 = arith.mulf %82, %86 : vector<12x120xf32>
    %88 = arith.addf %77, %87 : vector<12x120xf32>
    %89 = vector.extract_strided_slice %81 {offsets = [1, 0], sizes = [12, 120], strides = [1, 1]} : vector<14x120xf32> to vector<12x120xf32>
    %90 = vector.extract_strided_slice %0 {offsets = [12, 0], sizes = [1, 120], strides = [1, 1]} : vector<18x120xf32> to vector<1x120xf32>
    %91 = vector.shape_cast %90 : vector<1x120xf32> to vector<120xf32>
    %92 = vector.shape_cast %91 : vector<120xf32> to vector<1x120xf32>
    %93 = vector.broadcast %92 : vector<1x120xf32> to vector<12x120xf32>
    %94 = arith.mulf %89, %93 : vector<12x120xf32>
    %95 = arith.addf %88, %94 : vector<12x120xf32>
    %96 = vector.extract_strided_slice %81 {offsets = [2, 0], sizes = [12, 120], strides = [1, 1]} : vector<14x120xf32> to vector<12x120xf32>
    %97 = vector.extract_strided_slice %0 {offsets = [15, 0], sizes = [1, 120], strides = [1, 1]} : vector<18x120xf32> to vector<1x120xf32>
    %98 = vector.shape_cast %97 : vector<1x120xf32> to vector<120xf32>
    %99 = vector.shape_cast %98 : vector<120xf32> to vector<1x120xf32>
    %100 = vector.broadcast %99 : vector<1x120xf32> to vector<12x120xf32>
    %101 = arith.mulf %96, %100 : vector<12x120xf32>
    %102 = arith.addf %95, %101 : vector<12x120xf32>
    %103 = vector.extract_strided_slice %79 {offsets = [0, 1], sizes = [14, 12], strides = [1, 1]} : vector<14x14xf32> to vector<14x12xf32>
    %104 = tpu.concatenate %103, %103, %103, %103, %103, %103, %103, %103, %103, %103 in 1 : vector<14x12xf32>, vector<14x12xf32>, vector<14x12xf32>, vector<14x12xf32>, vector<14x12xf32>, vector<14x12xf32>, vector<14x12xf32>, vector<14x12xf32>, vector<14x12xf32>, vector<14x12xf32> -> vector<14x120xf32>
    %105 = vector.extract_strided_slice %104 {offsets = [0, 0], sizes = [12, 120], strides = [1, 1]} : vector<14x120xf32> to vector<12x120xf32>
    %106 = vector.extract_strided_slice %0 {offsets = [10, 0], sizes = [1, 120], strides = [1, 1]} : vector<18x120xf32> to vector<1x120xf32>
    %107 = vector.shape_cast %106 : vector<1x120xf32> to vector<120xf32>
    %108 = vector.shape_cast %107 : vector<120xf32> to vector<1x120xf32>
    %109 = vector.broadcast %108 : vector<1x120xf32> to vector<12x120xf32>
    %110 = arith.mulf %105, %109 : vector<12x120xf32>
    %111 = arith.addf %102, %110 : vector<12x120xf32>
    %112 = vector.extract_strided_slice %104 {offsets = [1, 0], sizes = [12, 120], strides = [1, 1]} : vector<14x120xf32> to vector<12x120xf32>
    %113 = vector.extract_strided_slice %0 {offsets = [13, 0], sizes = [1, 120], strides = [1, 1]} : vector<18x120xf32> to vector<1x120xf32>
    %114 = vector.shape_cast %113 : vector<1x120xf32> to vector<120xf32>
    %115 = vector.shape_cast %114 : vector<120xf32> to vector<1x120xf32>
    %116 = vector.broadcast %115 : vector<1x120xf32> to vector<12x120xf32>
    %117 = arith.mulf %112, %116 : vector<12x120xf32>
    %118 = arith.addf %111, %117 : vector<12x120xf32>
    %119 = vector.extract_strided_slice %104 {offsets = [2, 0], sizes = [12, 120], strides = [1, 1]} : vector<14x120xf32> to vector<12x120xf32>
    %120 = vector.extract_strided_slice %0 {offsets = [16, 0], sizes = [1, 120], strides = [1, 1]} : vector<18x120xf32> to vector<1x120xf32>
    %121 = vector.shape_cast %120 : vector<1x120xf32> to vector<120xf32>
    %122 = vector.shape_cast %121 : vector<120xf32> to vector<1x120xf32>
    %123 = vector.broadcast %122 : vector<1x120xf32> to vector<12x120xf32>
    %124 = arith.mulf %119, %123 : vector<12x120xf32>
    %125 = arith.addf %118, %124 : vector<12x120xf32>
    %126 = vector.extract_strided_slice %79 {offsets = [0, 2], sizes = [14, 12], strides = [1, 1]} : vector<14x14xf32> to vector<14x12xf32>
    %127 = tpu.concatenate %126, %126, %126, %126, %126, %126, %126, %126, %126, %126 in 1 : vector<14x12xf32>, vector<14x12xf32>, vector<14x12xf32>, vector<14x12xf32>, vector<14x12xf32>, vector<14x12xf32>, vector<14x12xf32>, vector<14x12xf32>, vector<14x12xf32>, vector<14x12xf32> -> vector<14x120xf32>
    %128 = vector.extract_strided_slice %127 {offsets = [0, 0], sizes = [12, 120], strides = [1, 1]} : vector<14x120xf32> to vector<12x120xf32>
    %129 = vector.extract_strided_slice %0 {offsets = [11, 0], sizes = [1, 120], strides = [1, 1]} : vector<18x120xf32> to vector<1x120xf32>
    %130 = vector.shape_cast %129 : vector<1x120xf32> to vector<120xf32>
    %131 = vector.shape_cast %130 : vector<120xf32> to vector<1x120xf32>
    %132 = vector.broadcast %131 : vector<1x120xf32> to vector<12x120xf32>
    %133 = arith.mulf %128, %132 : vector<12x120xf32>
    %134 = arith.addf %125, %133 : vector<12x120xf32>
    %135 = vector.extract_strided_slice %127 {offsets = [1, 0], sizes = [12, 120], strides = [1, 1]} : vector<14x120xf32> to vector<12x120xf32>
    %136 = vector.extract_strided_slice %0 {offsets = [14, 0], sizes = [1, 120], strides = [1, 1]} : vector<18x120xf32> to vector<1x120xf32>
    %137 = vector.shape_cast %136 : vector<1x120xf32> to vector<120xf32>
    %138 = vector.shape_cast %137 : vector<120xf32> to vector<1x120xf32>
    %139 = vector.broadcast %138 : vector<1x120xf32> to vector<12x120xf32>
    %140 = arith.mulf %135, %139 : vector<12x120xf32>
    %141 = arith.addf %134, %140 : vector<12x120xf32>
    %142 = vector.extract_strided_slice %127 {offsets = [2, 0], sizes = [12, 120], strides = [1, 1]} : vector<14x120xf32> to vector<12x120xf32>
    %143 = vector.extract_strided_slice %0 {offsets = [17, 0], sizes = [1, 120], strides = [1, 1]} : vector<18x120xf32> to vector<1x120xf32>
    %144 = vector.shape_cast %143 : vector<1x120xf32> to vector<120xf32>
    %145 = vector.shape_cast %144 : vector<120xf32> to vector<1x120xf32>
    %146 = vector.broadcast %145 : vector<1x120xf32> to vector<12x120xf32>
    %147 = arith.mulf %142, %146 : vector<12x120xf32>
    %148 = arith.addf %141, %147 : vector<12x120xf32>
    %c0_16 = arith.constant 0 : index
    %c0_17 = arith.constant 0 : index
    %c0_18 = arith.constant 0 : index
    %149 = vector.load %arg3[%c0_16, %c0_17, %c0_18] : memref<2x12x120xf32, #tpu.memory_space<vmem>>, vector<1x12x120xf32>
    %150 = vector.shape_cast %149 : vector<1x12x120xf32> to vector<12x120xf32>
    %151 = vector.shape_cast %148 : vector<12x120xf32> to vector<1x12x120xf32>
    tpu.vector_store %arg3[%c0_16, %c0_17, %c0_18], %151 {strides = array<i32>} : memref<2x12x120xf32, #tpu.memory_space<vmem>>, vector<1x12x120xf32>,
    %c1_19 = arith.constant 1 : index
    %c0_20 = arith.constant 0 : index
    %c0_21 = arith.constant 0 : index
    %c0_22 = arith.constant 0 : index
    %152 = vector.load %arg2[%c1_19, %c0_20, %c0_21, %c0_22] : memref<2x2x8x8xf32, #tpu.memory_space<vmem>>, vector<1x2x8x8xf32>
    %153 = vector.shape_cast %152 : vector<1x2x8x8xf32> to vector<2x8x8xf32>
    %c0_23 = arith.constant 0 : index
    %c3_24 = arith.constant 3 : index
    %c3_25 = arith.constant 3 : index
    %154 = vector.load %arg4[%c0_23, %c3_24, %c3_25] : memref<2x14x14xf32, #tpu.memory_space<vmem>>, vector<2x8x8xf32>
    tpu.vector_store %arg4[%c0_23, %c3_24, %c3_25], %153 {strides = array<i32>} : memref<2x14x14xf32, #tpu.memory_space<vmem>>, vector<2x8x8xf32>,
    %cst_26 = arith.constant 0.000000e+00 : f32
    %155 = vector.broadcast %cst_26 : f32 to vector<12x120xf32>
    %c0_27 = arith.constant 0 : index
    %c0_28 = arith.constant 0 : index
    %c0_29 = arith.constant 0 : index
    %156 = vector.load %arg4[%c0_27, %c0_28, %c0_29] : memref<2x14x14xf32, #tpu.memory_space<vmem>>, vector<1x14x14xf32>
    %157 = vector.shape_cast %156 : vector<1x14x14xf32> to vector<14x14xf32>
    %158 = vector.extract_strided_slice %157 {offsets = [0, 0], sizes = [14, 12], strides = [1, 1]} : vector<14x14xf32> to vector<14x12xf32>
    %159 = tpu.concatenate %158, %158, %158, %158, %158, %158, %158, %158, %158, %158 in 1 : vector<14x12xf32>, vector<14x12xf32>, vector<14x12xf32>, vector<14x12xf32>, vector<14x12xf32>, vector<14x12xf32>, vector<14x12xf32>, vector<14x12xf32>, vector<14x12xf32>, vector<14x12xf32> -> vector<14x120xf32>
    %160 = vector.extract_strided_slice %159 {offsets = [0, 0], sizes = [12, 120], strides = [1, 1]} : vector<14x120xf32> to vector<12x120xf32>
    %161 = vector.extract_strided_slice %0 {offsets = [0, 0], sizes = [1, 120], strides = [1, 1]} : vector<18x120xf32> to vector<1x120xf32>
    %162 = vector.shape_cast %161 : vector<1x120xf32> to vector<120xf32>
    %163 = vector.shape_cast %162 : vector<120xf32> to vector<1x120xf32>
    %164 = vector.broadcast %163 : vector<1x120xf32> to vector<12x120xf32>
    %165 = arith.mulf %160, %164 : vector<12x120xf32>
    %166 = arith.addf %155, %165 : vector<12x120xf32>
    %167 = vector.extract_strided_slice %159 {offsets = [1, 0], sizes = [12, 120], strides = [1, 1]} : vector<14x120xf32> to vector<12x120xf32>
    %168 = vector.extract_strided_slice %0 {offsets = [3, 0], sizes = [1, 120], strides = [1, 1]} : vector<18x120xf32> to vector<1x120xf32>
    %169 = vector.shape_cast %168 : vector<1x120xf32> to vector<120xf32>
    %170 = vector.shape_cast %169 : vector<120xf32> to vector<1x120xf32>
    %171 = vector.broadcast %170 : vector<1x120xf32> to vector<12x120xf32>
    %172 = arith.mulf %167, %171 : vector<12x120xf32>
    %173 = arith.addf %166, %172 : vector<12x120xf32>
    %174 = vector.extract_strided_slice %159 {offsets = [2, 0], sizes = [12, 120], strides = [1, 1]} : vector<14x120xf32> to vector<12x120xf32>
    %175 = vector.extract_strided_slice %0 {offsets = [6, 0], sizes = [1, 120], strides = [1, 1]} : vector<18x120xf32> to vector<1x120xf32>
    %176 = vector.shape_cast %175 : vector<1x120xf32> to vector<120xf32>
    %177 = vector.shape_cast %176 : vector<120xf32> to vector<1x120xf32>
    %178 = vector.broadcast %177 : vector<1x120xf32> to vector<12x120xf32>
    %179 = arith.mulf %174, %178 : vector<12x120xf32>
    %180 = arith.addf %173, %179 : vector<12x120xf32>
    %181 = vector.extract_strided_slice %157 {offsets = [0, 1], sizes = [14, 12], strides = [1, 1]} : vector<14x14xf32> to vector<14x12xf32>
    %182 = tpu.concatenate %181, %181, %181, %181, %181, %181, %181, %181, %181, %181 in 1 : vector<14x12xf32>, vector<14x12xf32>, vector<14x12xf32>, vector<14x12xf32>, vector<14x12xf32>, vector<14x12xf32>, vector<14x12xf32>, vector<14x12xf32>, vector<14x12xf32>, vector<14x12xf32> -> vector<14x120xf32>
    %183 = vector.extract_strided_slice %182 {offsets = [0, 0], sizes = [12, 120], strides = [1, 1]} : vector<14x120xf32> to vector<12x120xf32>
    %184 = vector.extract_strided_slice %0 {offsets = [1, 0], sizes = [1, 120], strides = [1, 1]} : vector<18x120xf32> to vector<1x120xf32>
    %185 = vector.shape_cast %184 : vector<1x120xf32> to vector<120xf32>
    %186 = vector.shape_cast %185 : vector<120xf32> to vector<1x120xf32>
    %187 = vector.broadcast %186 : vector<1x120xf32> to vector<12x120xf32>
    %188 = arith.mulf %183, %187 : vector<12x120xf32>
    %189 = arith.addf %180, %188 : vector<12x120xf32>
    %190 = vector.extract_strided_slice %182 {offsets = [1, 0], sizes = [12, 120], strides = [1, 1]} : vector<14x120xf32> to vector<12x120xf32>
    %191 = vector.extract_strided_slice %0 {offsets = [4, 0], sizes = [1, 120], strides = [1, 1]} : vector<18x120xf32> to vector<1x120xf32>
    %192 = vector.shape_cast %191 : vector<1x120xf32> to vector<120xf32>
    %193 = vector.shape_cast %192 : vector<120xf32> to vector<1x120xf32>
    %194 = vector.broadcast %193 : vector<1x120xf32> to vector<12x120xf32>
    %195 = arith.mulf %190, %194 : vector<12x120xf32>
    %196 = arith.addf %189, %195 : vector<12x120xf32>
    %197 = vector.extract_strided_slice %182 {offsets = [2, 0], sizes = [12, 120], strides = [1, 1]} : vector<14x120xf32> to vector<12x120xf32>
    %198 = vector.extract_strided_slice %0 {offsets = [7, 0], sizes = [1, 120], strides = [1, 1]} : vector<18x120xf32> to vector<1x120xf32>
    %199 = vector.shape_cast %198 : vector<1x120xf32> to vector<120xf32>
    %200 = vector.shape_cast %199 : vector<120xf32> to vector<1x120xf32>
    %201 = vector.broadcast %200 : vector<1x120xf32> to vector<12x120xf32>
    %202 = arith.mulf %197, %201 : vector<12x120xf32>
    %203 = arith.addf %196, %202 : vector<12x120xf32>
    %204 = vector.extract_strided_slice %157 {offsets = [0, 2], sizes = [14, 12], strides = [1, 1]} : vector<14x14xf32> to vector<14x12xf32>
    %205 = tpu.concatenate %204, %204, %204, %204, %204, %204, %204, %204, %204, %204 in 1 : vector<14x12xf32>, vector<14x12xf32>, vector<14x12xf32>, vector<14x12xf32>, vector<14x12xf32>, vector<14x12xf32>, vector<14x12xf32>, vector<14x12xf32>, vector<14x12xf32>, vector<14x12xf32> -> vector<14x120xf32>
    %206 = vector.extract_strided_slice %205 {offsets = [0, 0], sizes = [12, 120], strides = [1, 1]} : vector<14x120xf32> to vector<12x120xf32>
    %207 = vector.extract_strided_slice %0 {offsets = [2, 0], sizes = [1, 120], strides = [1, 1]} : vector<18x120xf32> to vector<1x120xf32>
    %208 = vector.shape_cast %207 : vector<1x120xf32> to vector<120xf32>
    %209 = vector.shape_cast %208 : vector<120xf32> to vector<1x120xf32>
    %210 = vector.broadcast %209 : vector<1x120xf32> to vector<12x120xf32>
    %211 = arith.mulf %206, %210 : vector<12x120xf32>
    %212 = arith.addf %203, %211 : vector<12x120xf32>
    %213 = vector.extract_strided_slice %205 {offsets = [1, 0], sizes = [12, 120], strides = [1, 1]} : vector<14x120xf32> to vector<12x120xf32>
    %214 = vector.extract_strided_slice %0 {offsets = [5, 0], sizes = [1, 120], strides = [1, 1]} : vector<18x120xf32> to vector<1x120xf32>
    %215 = vector.shape_cast %214 : vector<1x120xf32> to vector<120xf32>
    %216 = vector.shape_cast %215 : vector<120xf32> to vector<1x120xf32>
    %217 = vector.broadcast %216 : vector<1x120xf32> to vector<12x120xf32>
    %218 = arith.mulf %213, %217 : vector<12x120xf32>
    %219 = arith.addf %212, %218 : vector<12x120xf32>
    %220 = vector.extract_strided_slice %205 {offsets = [2, 0], sizes = [12, 120], strides = [1, 1]} : vector<14x120xf32> to vector<12x120xf32>
    %221 = vector.extract_strided_slice %0 {offsets = [8, 0], sizes = [1, 120], strides = [1, 1]} : vector<18x120xf32> to vector<1x120xf32>
    %222 = vector.shape_cast %221 : vector<1x120xf32> to vector<120xf32>
    %223 = vector.shape_cast %222 : vector<120xf32> to vector<1x120xf32>
    %224 = vector.broadcast %223 : vector<1x120xf32> to vector<12x120xf32>
    %225 = arith.mulf %220, %224 : vector<12x120xf32>
    %226 = arith.addf %219, %225 : vector<12x120xf32>
    %c1_30 = arith.constant 1 : index
    %c0_31 = arith.constant 0 : index
    %c0_32 = arith.constant 0 : index
    %227 = vector.load %arg4[%c1_30, %c0_31, %c0_32] : memref<2x14x14xf32, #tpu.memory_space<vmem>>, vector<1x14x14xf32>
    %228 = vector.shape_cast %227 : vector<1x14x14xf32> to vector<14x14xf32>
    %229 = vector.extract_strided_slice %228 {offsets = [0, 0], sizes = [14, 12], strides = [1, 1]} : vector<14x14xf32> to vector<14x12xf32>
    %230 = tpu.concatenate %229, %229, %229, %229, %229, %229, %229, %229, %229, %229 in 1 : vector<14x12xf32>, vector<14x12xf32>, vector<14x12xf32>, vector<14x12xf32>, vector<14x12xf32>, vector<14x12xf32>, vector<14x12xf32>, vector<14x12xf32>, vector<14x12xf32>, vector<14x12xf32> -> vector<14x120xf32>
    %231 = vector.extract_strided_slice %230 {offsets = [0, 0], sizes = [12, 120], strides = [1, 1]} : vector<14x120xf32> to vector<12x120xf32>
    %232 = vector.extract_strided_slice %0 {offsets = [9, 0], sizes = [1, 120], strides = [1, 1]} : vector<18x120xf32> to vector<1x120xf32>
    %233 = vector.shape_cast %232 : vector<1x120xf32> to vector<120xf32>
    %234 = vector.shape_cast %233 : vector<120xf32> to vector<1x120xf32>
    %235 = vector.broadcast %234 : vector<1x120xf32> to vector<12x120xf32>
    %236 = arith.mulf %231, %235 : vector<12x120xf32>
    %237 = arith.addf %226, %236 : vector<12x120xf32>
    %238 = vector.extract_strided_slice %230 {offsets = [1, 0], sizes = [12, 120], strides = [1, 1]} : vector<14x120xf32> to vector<12x120xf32>
    %239 = vector.extract_strided_slice %0 {offsets = [12, 0], sizes = [1, 120], strides = [1, 1]} : vector<18x120xf32> to vector<1x120xf32>
    %240 = vector.shape_cast %239 : vector<1x120xf32> to vector<120xf32>
    %241 = vector.shape_cast %240 : vector<120xf32> to vector<1x120xf32>
    %242 = vector.broadcast %241 : vector<1x120xf32> to vector<12x120xf32>
    %243 = arith.mulf %238, %242 : vector<12x120xf32>
    %244 = arith.addf %237, %243 : vector<12x120xf32>
    %245 = vector.extract_strided_slice %230 {offsets = [2, 0], sizes = [12, 120], strides = [1, 1]} : vector<14x120xf32> to vector<12x120xf32>
    %246 = vector.extract_strided_slice %0 {offsets = [15, 0], sizes = [1, 120], strides = [1, 1]} : vector<18x120xf32> to vector<1x120xf32>
    %247 = vector.shape_cast %246 : vector<1x120xf32> to vector<120xf32>
    %248 = vector.shape_cast %247 : vector<120xf32> to vector<1x120xf32>
    %249 = vector.broadcast %248 : vector<1x120xf32> to vector<12x120xf32>
    %250 = arith.mulf %245, %249 : vector<12x120xf32>
    %251 = arith.addf %244, %250 : vector<12x120xf32>
    %252 = vector.extract_strided_slice %228 {offsets = [0, 1], sizes = [14, 12], strides = [1, 1]} : vector<14x14xf32> to vector<14x12xf32>
    %253 = tpu.concatenate %252, %252, %252, %252, %252, %252, %252, %252, %252, %252 in 1 : vector<14x12xf32>, vector<14x12xf32>, vector<14x12xf32>, vector<14x12xf32>, vector<14x12xf32>, vector<14x12xf32>, vector<14x12xf32>, vector<14x12xf32>, vector<14x12xf32>, vector<14x12xf32> -> vector<14x120xf32>
    %254 = vector.extract_strided_slice %253 {offsets = [0, 0], sizes = [12, 120], strides = [1, 1]} : vector<14x120xf32> to vector<12x120xf32>
    %255 = vector.extract_strided_slice %0 {offsets = [10, 0], sizes = [1, 120], strides = [1, 1]} : vector<18x120xf32> to vector<1x120xf32>
    %256 = vector.shape_cast %255 : vector<1x120xf32> to vector<120xf32>
    %257 = vector.shape_cast %256 : vector<120xf32> to vector<1x120xf32>
    %258 = vector.broadcast %257 : vector<1x120xf32> to vector<12x120xf32>
    %259 = arith.mulf %254, %258 : vector<12x120xf32>
    %260 = arith.addf %251, %259 : vector<12x120xf32>
    %261 = vector.extract_strided_slice %253 {offsets = [1, 0], sizes = [12, 120], strides = [1, 1]} : vector<14x120xf32> to vector<12x120xf32>
    %262 = vector.extract_strided_slice %0 {offsets = [13, 0], sizes = [1, 120], strides = [1, 1]} : vector<18x120xf32> to vector<1x120xf32>
    %263 = vector.shape_cast %262 : vector<1x120xf32> to vector<120xf32>
    %264 = vector.shape_cast %263 : vector<120xf32> to vector<1x120xf32>
    %265 = vector.broadcast %264 : vector<1x120xf32> to vector<12x120xf32>
    %266 = arith.mulf %261, %265 : vector<12x120xf32>
    %267 = arith.addf %260, %266 : vector<12x120xf32>
    %268 = vector.extract_strided_slice %253 {offsets = [2, 0], sizes = [12, 120], strides = [1, 1]} : vector<14x120xf32> to vector<12x120xf32>
    %269 = vector.extract_strided_slice %0 {offsets = [16, 0], sizes = [1, 120], strides = [1, 1]} : vector<18x120xf32> to vector<1x120xf32>
    %270 = vector.shape_cast %269 : vector<1x120xf32> to vector<120xf32>
    %271 = vector.shape_cast %270 : vector<120xf32> to vector<1x120xf32>
    %272 = vector.broadcast %271 : vector<1x120xf32> to vector<12x120xf32>
    %273 = arith.mulf %268, %272 : vector<12x120xf32>
    %274 = arith.addf %267, %273 : vector<12x120xf32>
    %275 = vector.extract_strided_slice %228 {offsets = [0, 2], sizes = [14, 12], strides = [1, 1]} : vector<14x14xf32> to vector<14x12xf32>
    %276 = tpu.concatenate %275, %275, %275, %275, %275, %275, %275, %275, %275, %275 in 1 : vector<14x12xf32>, vector<14x12xf32>, vector<14x12xf32>, vector<14x12xf32>, vector<14x12xf32>, vector<14x12xf32>, vector<14x12xf32>, vector<14x12xf32>, vector<14x12xf32>, vector<14x12xf32> -> vector<14x120xf32>
    %277 = vector.extract_strided_slice %276 {offsets = [0, 0], sizes = [12, 120], strides = [1, 1]} : vector<14x120xf32> to vector<12x120xf32>
    %278 = vector.extract_strided_slice %0 {offsets = [11, 0], sizes = [1, 120], strides = [1, 1]} : vector<18x120xf32> to vector<1x120xf32>
    %279 = vector.shape_cast %278 : vector<1x120xf32> to vector<120xf32>
    %280 = vector.shape_cast %279 : vector<120xf32> to vector<1x120xf32>
    %281 = vector.broadcast %280 : vector<1x120xf32> to vector<12x120xf32>
    %282 = arith.mulf %277, %281 : vector<12x120xf32>
    %283 = arith.addf %274, %282 : vector<12x120xf32>
    %284 = vector.extract_strided_slice %276 {offsets = [1, 0], sizes = [12, 120], strides = [1, 1]} : vector<14x120xf32> to vector<12x120xf32>
    %285 = vector.extract_strided_slice %0 {offsets = [14, 0], sizes = [1, 120], strides = [1, 1]} : vector<18x120xf32> to vector<1x120xf32>
    %286 = vector.shape_cast %285 : vector<1x120xf32> to vector<120xf32>
    %287 = vector.shape_cast %286 : vector<120xf32> to vector<1x120xf32>
    %288 = vector.broadcast %287 : vector<1x120xf32> to vector<12x120xf32>
    %289 = arith.mulf %284, %288 : vector<12x120xf32>
    %290 = arith.addf %283, %289 : vector<12x120xf32>
    %291 = vector.extract_strided_slice %276 {offsets = [2, 0], sizes = [12, 120], strides = [1, 1]} : vector<14x120xf32> to vector<12x120xf32>
    %292 = vector.extract_strided_slice %0 {offsets = [17, 0], sizes = [1, 120], strides = [1, 1]} : vector<18x120xf32> to vector<1x120xf32>
    %293 = vector.shape_cast %292 : vector<1x120xf32> to vector<120xf32>
    %294 = vector.shape_cast %293 : vector<120xf32> to vector<1x120xf32>
    %295 = vector.broadcast %294 : vector<1x120xf32> to vector<12x120xf32>
    %296 = arith.mulf %291, %295 : vector<12x120xf32>
    %297 = arith.addf %290, %296 : vector<12x120xf32>
    %c1_33 = arith.constant 1 : index
    %c0_34 = arith.constant 0 : index
    %c0_35 = arith.constant 0 : index
    %298 = vector.load %arg3[%c1_33, %c0_34, %c0_35] : memref<2x12x120xf32, #tpu.memory_space<vmem>>, vector<1x12x120xf32>
    %299 = vector.shape_cast %298 : vector<1x12x120xf32> to vector<12x120xf32>
    %300 = vector.shape_cast %297 : vector<12x120xf32> to vector<1x12x120xf32>
    tpu.vector_store %arg3[%c1_33, %c0_34, %c0_35], %300 {strides = array<i32>} : memref<2x12x120xf32, #tpu.memory_space<vmem>>, vector<1x12x120xf32>,
    return
  }
  func.func @transform_0(%arg0: i32) -> (i32, i32) {
    %c0_i32 = arith.constant 0 : i32
    %c0_i32_0 = arith.constant 0 : i32
    %c0_i32_1 = arith.constant 0 : i32
    return %c0_i32, %c0_i32_0 : i32, i32
  }
  func.func @transform_1(%arg0: i32) -> (i32, i32, i32, i32) {
    %c0_i32 = arith.constant 0 : i32
    %c0_i32_0 = arith.constant 0 : i32
    %c0_i32_1 = arith.constant 0 : i32
    %c0_i32_2 = arith.constant 0 : i32
    %c0_i32_3 = arith.constant 0 : i32
    return %c0_i32, %c0_i32_0, %c0_i32_1, %c0_i32_2 : i32, i32, i32, i32
  }
  func.func @transform_2(%arg0: i32) -> (i32, i32, i32) {
    %c0_i32 = arith.constant 0 : i32
    %c0_i32_0 = arith.constant 0 : i32
    %c0_i32_1 = arith.constant 0 : i32
    %c0_i32_2 = arith.constant 0 : i32
    return %c0_i32, %c0_i32_0, %c0_i32_1 : i32, i32, i32
  }
}

</mosaic_0001>

<llo_original>
// kernel: conv2d_pad3.1
$region0: #{conv2d_pad3.1}
  #allocation0 [shape = 'u32[]', space=smem, size = 0x4, offset = 0x4, fixed_abs, tag = 'smem constant byte address 0x4 - core index']
  #allocation1 [shape = 'u32[144,128]{1,0:T(1,128)}', space=vmem, size = 0x12000, scoped, tag = 'internal scratch']
  #allocation2 [shape = 'f32[2,14,14]{2,1,0:T(8,128)}', space=vmem, size = 0x4000, scoped, tag = 'scratch operand']
  %s0 = inlined_call_operand.vmem [shape: f32[18,120], index: 0, kind: input, shape index: {}]
  %s1 = inlined_call_operand.vmem [shape: f32[2,2,8,8], index: 1, kind: input, shape index: {}]
  %s2 = inlined_call_operand.vmem [shape: f32[2,12,120], index: 2, kind: output, shape index: {}]
  %s3 = sld [smem:[#allocation0]]
  $region18: #{conv2d_pad3.1} parent=0
    _
  %s5 = ssub.s32 1, %s3
  %s6 = scalar_select 0, %s5, %s3
  // Predicated region
  $region2: #{conv2d_pad3.1} parent=0 // pred_check
    _
  $region3: #{conv2d_pad3.1} parent=0 // pred_check_branch
    %8 = sbr.rel (0) target = $region5
  $region4: #{conv2d_pad3.1} parent=0 // pred_region
    _
  $region5: #{conv2d_pad3.1} parent=0 // pred_fallthru
    _
  // Predicated region
  $region6: #{conv2d_pad3.1} parent=0 // pred_check
    _
  $region7: #{conv2d_pad3.1} parent=0 // pred_check_branch
    %10 = sbr.rel (0) target = $region9
  $region8: #{conv2d_pad3.1} parent=0 // pred_region
    _
  $region9: #{conv2d_pad3.1} parent=0 // pred_fallthru
    _
  %v11 = vld [vmem:[%s0] sm:$0xff]
  %v12 = vld [vmem:[%s0 + $0x8] sm:$0xff]
  %v13 = vld [vmem:[%s0 + $0x10] sm:$0x3]
  %vm14 = vcmask 113664
  %15 = vst.msk [vmem:[#allocation2] sm:$0xff] %vm14, 0.0
  %vm16 = vcmask 111616
  %17 = vst.msk [vmem:[#allocation2 + $0x8] sm:$0x3f] %vm16, 0.0
  %18 = vst.msk [vmem:[#allocation2 + $0x10] sm:$0xff] %vm14, 0.0
  %19 = vst.msk [vmem:[#allocation2 + $0x18] sm:$0x3f] %vm16, 0.0
  %v20 = vld [vmem:[%s1] sm:$0xff]
  %v21 = vld [vmem:[%s1 + $0x8] sm:$0xff]
  %24 = vrot.lane.b32.xlu0 %v20, 3
  %v25 = vpop.permute.xlu0 %24
  %26 = vrot.lane.b32.xlu0 %v21, 3
  %v27 = vpop.permute.xlu0 %26
  %vm30 = vcmask 89112
  %31 = vst.msk [vmem:[#allocation2 + $0x3] sm:$0xff] %vm30, %v25
  %32 = vst.msk [vmem:[#allocation2 + $0x13] sm:$0xff] %vm30, %v27
  %v33 = vld [vmem:[#allocation2] sm:$0xff]
  %v34 = vld [vmem:[#allocation2 + $0x8] sm:$0x3f]
  %37 = vrot.lane.b32.xlu0 %v33, 12
  %v38 = vpop.permute.xlu0 %37
  %39 = vrot.lane.b32.xlu0 %v34, 12
  %v40 = vpop.permute.xlu0 %39
  %43 = vrot.lane.b32.xlu0 %v33, 24
  %v44 = vpop.permute.xlu0 %43
  %45 = vrot.lane.b32.xlu0 %v34, 24
  %v46 = vpop.permute.xlu0 %45
  %49 = vrot.lane.b32.xlu0 %v33, 36
  %v50 = vpop.permute.xlu0 %49
  %51 = vrot.lane.b32.xlu0 %v34, 36
  %v52 = vpop.permute.xlu0 %51
  %55 = vrot.lane.b32.xlu0 %v33, 48
  %v56 = vpop.permute.xlu0 %55
  %57 = vrot.lane.b32.xlu0 %v34, 48
  %v58 = vpop.permute.xlu0 %57
  %61 = vrot.lane.b32.xlu0 %v33, 60
  %v62 = vpop.permute.xlu0 %61
  %63 = vrot.lane.b32.xlu0 %v34, 60
  %v64 = vpop.permute.xlu0 %63
  %67 = vrot.lane.b32.xlu0 %v33, 72
  %v68 = vpop.permute.xlu0 %67
  %69 = vrot.lane.b32.xlu0 %v34, 72
  %v70 = vpop.permute.xlu0 %69
  %73 = vrot.lane.b32.xlu0 %v33, 84
  %v74 = vpop.permute.xlu0 %73
  %75 = vrot.lane.b32.xlu0 %v34, 84
  %v76 = vpop.permute.xlu0 %75
  %79 = vrot.lane.b32.xlu0 %v33, 96
  %v80 = vpop.permute.xlu0 %79
  %81 = vrot.lane.b32.xlu0 %v34, 96
  %v82 = vpop.permute.xlu0 %81
  %85 = vrot.lane.b32.xlu0 %v33, 108
  %v86 = vpop.permute.xlu0 %85
  %87 = vrot.lane.b32.xlu0 %v34, 108
  %v88 = vpop.permute.xlu0 %87
  %vm91 = vcmask 97280
  %v92 = vsel %vm91, %v33, %v38
  %v93 = vsel %vm91, %v34, %v40
  %vm94 = vcmask 195584
  %v95 = vsel %vm94, %v92, %v44
  %v96 = vsel %vm94, %v93, %v46
  %vm97 = vcmask 293888
  %v98 = vsel %vm97, %v95, %v50
  %v99 = vsel %vm97, %v96, %v52
  %vm100 = vcmask 392192
  %v101 = vsel %vm100, %v98, %v56
  %v102 = vsel %vm100, %v99, %v58
  %vm103 = vcmask 490496
  %v104 = vsel %vm103, %v101, %v62
  %v105 = vsel %vm103, %v102, %v64
  %vm106 = vcmask 588800
  %v107 = vsel %vm106, %v104, %v68
  %v108 = vsel %vm106, %v105, %v70
  %vm109 = vcmask 687104
  %v110 = vsel %vm109, %v107, %v74
  %v111 = vsel %vm109, %v108, %v76
  %vm112 = vcmask 785408
  %v113 = vsel %vm112, %v110, %v80
  %v114 = vsel %vm112, %v111, %v82
  %vm115 = vcmask 883712
  %v116 = vsel %vm115, %v113, %v86
  %v117 = vsel %vm115, %v114, %v88
  %v118 = vlaneseq
  %v119 = vshrl.u32 %v118, 7
  %v120 = vsub.s32 0, %v119
  %v121 = vrot.slane %v11, %v120
  %v122 = vmul.f32 %v116, %v121
  %v123 = vmul.f32 %v117, %v121
  %v124 = vadd.f32 %v122, 0.0
  %v125 = vadd.f32 %v123, 0.0
  %v126 = vlaneseq
  %v127 = vshrl.u32 %v126, 7
  %v128 = vsub.s32 3, %v127
  %v129 = vrot.slane %v11, %v128
  %v130 = vmul.f32 %v116, %v129
  %v131 = vmul.f32 %v117, %v129
  %vm134 = vcmask 1046528
  %v135 = vrot.slane %v130, 1
  %v136 = vrot.slane %v131, 1
  %v137 = vsel %vm134, %v135, %v136
  %v140 = vadd.f32 %v124, %v137
  %v141 = vadd.f32 %v125, %v136
  %v142 = vlaneseq
  %v143 = vshrl.u32 %v142, 7
  %v144 = vsub.s32 6, %v143
  %v145 = vrot.slane %v11, %v144
  %v146 = vmul.f32 %v116, %v145
  %v147 = vmul.f32 %v117, %v145
  %vm150 = vcmask 1045504
  %v151 = vrot.slane %v146, 2
  %v152 = vrot.slane %v147, 2
  %v153 = vsel %vm150, %v151, %v152
  %v156 = vadd.f32 %v140, %v153
  %v157 = vadd.f32 %v141, %v152
  %158 = vrot.lane.b32.xlu0 %v33, 127
  %v159 = vpop.permute.xlu0 %158
  %160 = vrot.lane.b32.xlu0 %v34, 127
  %v161 = vpop.permute.xlu0 %160
  %164 = vrot.lane.b32.xlu0 %v33, 11
  %v165 = vpop.permute.xlu0 %164
  %166 = vrot.lane.b32.xlu0 %v34, 11
  %v167 = vpop.permute.xlu0 %166
  %170 = vrot.lane.b32.xlu0 %v33, 23
  %v171 = vpop.permute.xlu0 %170
  %172 = vrot.lane.b32.xlu0 %v34, 23
  %v173 = vpop.permute.xlu0 %172
  %176 = vrot.lane.b32.xlu0 %v33, 35
  %v177 = vpop.permute.xlu0 %176
  %178 = vrot.lane.b32.xlu0 %v34, 35
  %v179 = vpop.permute.xlu0 %178
  %182 = vrot.lane.b32.xlu0 %v33, 47
  %v183 = vpop.permute.xlu0 %182
  %184 = vrot.lane.b32.xlu0 %v34, 47
  %v185 = vpop.permute.xlu0 %184
  %188 = vrot.lane.b32.xlu0 %v33, 59
  %v189 = vpop.permute.xlu0 %188
  %190 = vrot.lane.b32.xlu0 %v34, 59
  %v191 = vpop.permute.xlu0 %190
  %194 = vrot.lane.b32.xlu0 %v33, 71
  %v195 = vpop.permute.xlu0 %194
  %196 = vrot.lane.b32.xlu0 %v34, 71
  %v197 = vpop.permute.xlu0 %196
  %200 = vrot.lane.b32.xlu0 %v33, 83
  %v201 = vpop.permute.xlu0 %200
  %202 = vrot.lane.b32.xlu0 %v34, 83
  %v203 = vpop.permute.xlu0 %202
  %206 = vrot.lane.b32.xlu0 %v33, 95
  %v207 = vpop.permute.xlu0 %206
  %208 = vrot.lane.b32.xlu0 %v34, 95
  %v209 = vpop.permute.xlu0 %208
  %212 = vrot.lane.b32.xlu0 %v33, 107
  %v213 = vpop.permute.xlu0 %212
  %214 = vrot.lane.b32.xlu0 %v34, 107
  %v215 = vpop.permute.xlu0 %214
  %v218 = vsel %vm91, %v159, %v165
  %v219 = vsel %vm91, %v161, %v167
  %v220 = vsel %vm94, %v218, %v171
  %v221 = vsel %vm94, %v219, %v173
  %v222 = vsel %vm97, %v220, %v177
  %v223 = vsel %vm97, %v221, %v179
  %v224 = vsel %vm100, %v222, %v183
  %v225 = vsel %vm100, %v223, %v185
  %v226 = vsel %vm103, %v224, %v189
  %v227 = vsel %vm103, %v225, %v191
  %v228 = vsel %vm106, %v226, %v195
  %v229 = vsel %vm106, %v227, %v197
  %v230 = vsel %vm109, %v228, %v201
  %v231 = vsel %vm109, %v229, %v203
  %v232 = vsel %vm112, %v230, %v207
  %v233 = vsel %vm112, %v231, %v209
  %v234 = vsel %vm115, %v232, %v213
  %v235 = vsel %vm115, %v233, %v215
  %v236 = vlaneseq
  %v237 = vshrl.u32 %v236, 7
  %v238 = vsub.s32 1, %v237
  %v239 = vrot.slane %v11, %v238
  %v240 = vmul.f32 %v234, %v239
  %v241 = vmul.f32 %v235, %v239
  %v242 = vadd.f32 %v156, %v240
  %v243 = vadd.f32 %v157, %v241
  %v244 = vlaneseq
  %v245 = vshrl.u32 %v244, 7
  %v246 = vsub.s32 4, %v245
  %v247 = vrot.slane %v11, %v246
  %v248 = vmul.f32 %v234, %v247
  %v249 = vmul.f32 %v235, %v247
  %v252 = vrot.slane %v248, 1
  %v253 = vrot.slane %v249, 1
  %v254 = vsel %vm134, %v252, %v253
  %v257 = vadd.f32 %v242, %v254
  %v258 = vadd.f32 %v243, %v253
  %v259 = vlaneseq
  %v260 = vshrl.u32 %v259, 7
  %v261 = vsub.s32 7, %v260
  %v262 = vrot.slane %v11, %v261
  %v263 = vmul.f32 %v234, %v262
  %v264 = vmul.f32 %v235, %v262
  %v267 = vrot.slane %v263, 2
  %v268 = vrot.slane %v264, 2
  %v269 = vsel %vm150, %v267, %v268
  %v272 = vadd.f32 %v257, %v269
  %v273 = vadd.f32 %v258, %v268
  %274 = vrot.lane.b32.xlu0 %v33, 126
  %v275 = vpop.permute.xlu0 %274
  %276 = vrot.lane.b32.xlu0 %v34, 126
  %v277 = vpop.permute.xlu0 %276
  %280 = vrot.lane.b32.xlu0 %v33, 10
  %v281 = vpop.permute.xlu0 %280
  %282 = vrot.lane.b32.xlu0 %v34, 10
  %v283 = vpop.permute.xlu0 %282
  %286 = vrot.lane.b32.xlu0 %v33, 22
  %v287 = vpop.permute.xlu0 %286
  %288 = vrot.lane.b32.xlu0 %v34, 22
  %v289 = vpop.permute.xlu0 %288
  %292 = vrot.lane.b32.xlu0 %v33, 34
  %v293 = vpop.permute.xlu0 %292
  %294 = vrot.lane.b32.xlu0 %v34, 34
  %v295 = vpop.permute.xlu0 %294
  %298 = vrot.lane.b32.xlu0 %v33, 46
  %v299 = vpop.permute.xlu0 %298
  %300 = vrot.lane.b32.xlu0 %v34, 46
  %v301 = vpop.permute.xlu0 %300
  %304 = vrot.lane.b32.xlu0 %v33, 58
  %v305 = vpop.permute.xlu0 %304
  %306 = vrot.lane.b32.xlu0 %v34, 58
  %v307 = vpop.permute.xlu0 %306
  %310 = vrot.lane.b32.xlu0 %v33, 70
  %v311 = vpop.permute.xlu0 %310
  %312 = vrot.lane.b32.xlu0 %v34, 70
  %v313 = vpop.permute.xlu0 %312
  %316 = vrot.lane.b32.xlu0 %v33, 82
  %v317 = vpop.permute.xlu0 %316
  %318 = vrot.lane.b32.xlu0 %v34, 82
  %v319 = vpop.permute.xlu0 %318
  %322 = vrot.lane.b32.xlu0 %v33, 94
  %v323 = vpop.permute.xlu0 %322
  %324 = vrot.lane.b32.xlu0 %v34, 94
  %v325 = vpop.permute.xlu0 %324
  %328 = vrot.lane.b32.xlu0 %v33, 106
  %v329 = vpop.permute.xlu0 %328
  %330 = vrot.lane.b32.xlu0 %v34, 106
  %v331 = vpop.permute.xlu0 %330
  %v334 = vsel %vm91, %v275, %v281
  %v335 = vsel %vm91, %v277, %v283
  %v336 = vsel %vm94, %v334, %v287
  %v337 = vsel %vm94, %v335, %v289
  %v338 = vsel %vm97, %v336, %v293
  %v339 = vsel %vm97, %v337, %v295
  %v340 = vsel %vm100, %v338, %v299
  %v341 = vsel %vm100, %v339, %v301
  %v342 = vsel %vm103, %v340, %v305
  %v343 = vsel %vm103, %v341, %v307
  %v344 = vsel %vm106, %v342, %v311
  %v345 = vsel %vm106, %v343, %v313
  %v346 = vsel %vm109, %v344, %v317
  %v347 = vsel %vm109, %v345, %v319
  %v348 = vsel %vm112, %v346, %v323
  %v349 = vsel %vm112, %v347, %v325
  %v350 = vsel %vm115, %v348, %v329
  %v351 = vsel %vm115, %v349, %v331
  %v352 = vlaneseq
  %v353 = vshrl.u32 %v352, 7
  %v354 = vsub.s32 2, %v353
  %v355 = vrot.slane %v11, %v354
  %v356 = vmul.f32 %v350, %v355
  %v357 = vmul.f32 %v351, %v355
  %v358 = vadd.f32 %v272, %v356
  %v359 = vadd.f32 %v273, %v357
  %v360 = vlaneseq
  %v361 = vshrl.u32 %v360, 7
  %v362 = vsub.s32 5, %v361
  %v363 = vrot.slane %v11, %v362
  %v364 = vmul.f32 %v350, %v363
  %v365 = vmul.f32 %v351, %v363
  %v368 = vrot.slane %v364, 1
  %v369 = vrot.slane %v365, 1
  %v370 = vsel %vm134, %v368, %v369
  %v373 = vadd.f32 %v358, %v370
  %v374 = vadd.f32 %v359, %v369
  %v375 = vlaneseq
  %v376 = vshrl.u32 %v375, 7
  %v377 = vsub.s32 0, %v376
  %v378 = vrot.slane %v12, %v377
  %v379 = vmul.f32 %v350, %v378
  %v380 = vmul.f32 %v351, %v378
  %v383 = vrot.slane %v379, 2
  %v384 = vrot.slane %v380, 2
  %v385 = vsel %vm150, %v383, %v384
  %v388 = vadd.f32 %v373, %v385
  %v389 = vadd.f32 %v374, %v384
  %s390 = scalar_lea.vmem [#allocation2], 16
  %v391 = vld [vmem:[%s390] sm:$0xff]
  %v392 = vld [vmem:[%s390 + $0x8] sm:$0x3f]
  %395 = vrot.lane.b32.xlu0 %v391, 12
  %v396 = vpop.permute.xlu0 %395
  %397 = vrot.lane.b32.xlu0 %v392, 12
  %v398 = vpop.permute.xlu0 %397
  %401 = vrot.lane.b32.xlu0 %v391, 24
  %v402 = vpop.permute.xlu0 %401
  %403 = vrot.lane.b32.xlu0 %v392, 24
  %v404 = vpop.permute.xlu0 %403
  %407 = vrot.lane.b32.xlu0 %v391, 36
  %v408 = vpop.permute.xlu0 %407
  %409 = vrot.lane.b32.xlu0 %v392, 36
  %v410 = vpop.permute.xlu0 %409
  %413 = vrot.lane.b32.xlu0 %v391, 48
  %v414 = vpop.permute.xlu0 %413
  %415 = vrot.lane.b32.xlu0 %v392, 48
  %v416 = vpop.permute.xlu0 %415
  %419 = vrot.lane.b32.xlu0 %v391, 60
  %v420 = vpop.permute.xlu0 %419
  %421 = vrot.lane.b32.xlu0 %v392, 60
  %v422 = vpop.permute.xlu0 %421
  %425 = vrot.lane.b32.xlu0 %v391, 72
  %v426 = vpop.permute.xlu0 %425
  %427 = vrot.lane.b32.xlu0 %v392, 72
  %v428 = vpop.permute.xlu0 %427
  %431 = vrot.lane.b32.xlu0 %v391, 84
  %v432 = vpop.permute.xlu0 %431
  %433 = vrot.lane.b32.xlu0 %v392, 84
  %v434 = vpop.permute.xlu0 %433
  %437 = vrot.lane.b32.xlu0 %v391, 96
  %v438 = vpop.permute.xlu0 %437
  %439 = vrot.lane.b32.xlu0 %v392, 96
  %v440 = vpop.permute.xlu0 %439
  %443 = vrot.lane.b32.xlu0 %v391, 108
  %v444 = vpop.permute.xlu0 %443
  %445 = vrot.lane.b32.xlu0 %v392, 108
  %v446 = vpop.permute.xlu0 %445
  %v449 = vsel %vm91, %v391, %v396
  %v450 = vsel %vm91, %v392, %v398
  %v451 = vsel %vm94, %v449, %v402
  %v452 = vsel %vm94, %v450, %v404
  %v453 = vsel %vm97, %v451, %v408
  %v454 = vsel %vm97, %v452, %v410
  %v455 = vsel %vm100, %v453, %v414
  %v456 = vsel %vm100, %v454, %v416
  %v457 = vsel %vm103, %v455, %v420
  %v458 = vsel %vm103, %v456, %v422
  %v459 = vsel %vm106, %v457, %v426
  %v460 = vsel %vm106, %v458, %v428
  %v461 = vsel %vm109, %v459, %v432
  %v462 = vsel %vm109, %v460, %v434
  %v463 = vsel %vm112, %v461, %v438
  %v464 = vsel %vm112, %v462, %v440
  %v465 = vsel %vm115, %v463, %v444
  %v466 = vsel %vm115, %v464, %v446
  %v467 = vlaneseq
  %v468 = vshrl.u32 %v467, 7
  %v469 = vsub.s32 1, %v468
  %v470 = vrot.slane %v12, %v469
  %v471 = vmul.f32 %v465, %v470
  %v472 = vmul.f32 %v466, %v470
  %v473 = vadd.f32 %v388, %v471
  %v474 = vadd.f32 %v389, %v472
  %v475 = vlaneseq
  %v476 = vshrl.u32 %v475, 7
  %v477 = vsub.s32 4, %v476
  %v478 = vrot.slane %v12, %v477
  %v479 = vmul.f32 %v465, %v478
  %v480 = vmul.f32 %v466, %v478
  %v483 = vrot.slane %v479, 1
  %v484 = vrot.slane %v480, 1
  %v485 = vsel %vm134, %v483, %v484
  %v488 = vadd.f32 %v473, %v485
  %v489 = vadd.f32 %v474, %v484
  %v490 = vlaneseq
  %v491 = vshrl.u32 %v490, 7
  %v492 = vsub.s32 7, %v491
  %v493 = vrot.slane %v12, %v492
  %v494 = vmul.f32 %v465, %v493
  %v495 = vmul.f32 %v466, %v493
  %v498 = vrot.slane %v494, 2
  %v499 = vrot.slane %v495, 2
  %v500 = vsel %vm150, %v498, %v499
  %v503 = vadd.f32 %v488, %v500
  %v504 = vadd.f32 %v489, %v499
  %505 = vrot.lane.b32.xlu0 %v391, 127
  %v506 = vpop.permute.xlu0 %505
  %507 = vrot.lane.b32.xlu0 %v392, 127
  %v508 = vpop.permute.xlu0 %507
  %511 = vrot.lane.b32.xlu0 %v391, 11
  %v512 = vpop.permute.xlu0 %511
  %513 = vrot.lane.b32.xlu0 %v392, 11
  %v514 = vpop.permute.xlu0 %513
  %517 = vrot.lane.b32.xlu0 %v391, 23
  %v518 = vpop.permute.xlu0 %517
  %519 = vrot.lane.b32.xlu0 %v392, 23
  %v520 = vpop.permute.xlu0 %519
  %523 = vrot.lane.b32.xlu0 %v391, 35
  %v524 = vpop.permute.xlu0 %523
  %525 = vrot.lane.b32.xlu0 %v392, 35
  %v526 = vpop.permute.xlu0 %525
  %529 = vrot.lane.b32.xlu0 %v391, 47
  %v530 = vpop.permute.xlu0 %529
  %531 = vrot.lane.b32.xlu0 %v392, 47
  %v532 = vpop.permute.xlu0 %531
  %535 = vrot.lane.b32.xlu0 %v391, 59
  %v536 = vpop.permute.xlu0 %535
  %537 = vrot.lane.b32.xlu0 %v392, 59
  %v538 = vpop.permute.xlu0 %537
  %541 = vrot.lane.b32.xlu0 %v391, 71
  %v542 = vpop.permute.xlu0 %541
  %543 = vrot.lane.b32.xlu0 %v392, 71
  %v544 = vpop.permute.xlu0 %543
  %547 = vrot.lane.b32.xlu0 %v391, 83
  %v548 = vpop.permute.xlu0 %547
  %549 = vrot.lane.b32.xlu0 %v392, 83
  %v550 = vpop.permute.xlu0 %549
  %553 = vrot.lane.b32.xlu0 %v391, 95
  %v554 = vpop.permute.xlu0 %553
  %555 = vrot.lane.b32.xlu0 %v392, 95
  %v556 = vpop.permute.xlu0 %555
  %559 = vrot.lane.b32.xlu0 %v391, 107
  %v560 = vpop.permute.xlu0 %559
  %561 = vrot.lane.b32.xlu0 %v392, 107
  %v562 = vpop.permute.xlu0 %561
  %v565 = vsel %vm91, %v506, %v512
  %v566 = vsel %vm91, %v508, %v514
  %v567 = vsel %vm94, %v565, %v518
  %v568 = vsel %vm94, %v566, %v520
  %v569 = vsel %vm97, %v567, %v524
  %v570 = vsel %vm97, %v568, %v526
  %v571 = vsel %vm100, %v569, %v530
  %v572 = vsel %vm100, %v570, %v532
  %v573 = vsel %vm103, %v571, %v536
  %v574 = vsel %vm103, %v572, %v538
  %v575 = vsel %vm106, %v573, %v542
  %v576 = vsel %vm106, %v574, %v544
  %v577 = vsel %vm109, %v575, %v548
  %v578 = vsel %vm109, %v576, %v550
  %v579 = vsel %vm112, %v577, %v554
  %v580 = vsel %vm112, %v578, %v556
  %v581 = vsel %vm115, %v579, %v560
  %v582 = vsel %vm115, %v580, %v562
  %v583 = vlaneseq
  %v584 = vshrl.u32 %v583, 7
  %v585 = vsub.s32 2, %v584
  %v586 = vrot.slane %v12, %v585
  %v587 = vmul.f32 %v581, %v586
  %v588 = vmul.f32 %v582, %v586
  %v589 = vadd.f32 %v503, %v587
  %v590 = vadd.f32 %v504, %v588
  %v591 = vlaneseq
  %v592 = vshrl.u32 %v591, 7
  %v593 = vsub.s32 5, %v592
  %v594 = vrot.slane %v12, %v593
  %v595 = vmul.f32 %v581, %v594
  %v596 = vmul.f32 %v582, %v594
  %v599 = vrot.slane %v595, 1
  %v600 = vrot.slane %v596, 1
  %v601 = vsel %vm134, %v599, %v600
  %v604 = vadd.f32 %v589, %v601
  %v605 = vadd.f32 %v590, %v600
  %v606 = vlaneseq
  %v607 = vshrl.u32 %v606, 7
  %v608 = vsub.s32 0, %v607
  %v609 = vrot.slane %v13, %v608
  %v610 = vmul.f32 %v581, %v609
  %v611 = vmul.f32 %v582, %v609
  %v614 = vrot.slane %v610, 2
  %v615 = vrot.slane %v611, 2
  %v616 = vsel %vm150, %v614, %v615
  %v619 = vadd.f32 %v604, %v616
  %v620 = vadd.f32 %v605, %v615
  %621 = vrot.lane.b32.xlu0 %v391, 126
  %v622 = vpop.permute.xlu0 %621
  %623 = vrot.lane.b32.xlu0 %v392, 126
  %v624 = vpop.permute.xlu0 %623
  %627 = vrot.lane.b32.xlu0 %v391, 10
  %v628 = vpop.permute.xlu0 %627
  %629 = vrot.lane.b32.xlu0 %v392, 10
  %v630 = vpop.permute.xlu0 %629
  %633 = vrot.lane.b32.xlu0 %v391, 22
  %v634 = vpop.permute.xlu0 %633
  %635 = vrot.lane.b32.xlu0 %v392, 22
  %v636 = vpop.permute.xlu0 %635
  %639 = vrot.lane.b32.xlu0 %v391, 34
  %v640 = vpop.permute.xlu0 %639
  %641 = vrot.lane.b32.xlu0 %v392, 34
  %v642 = vpop.permute.xlu0 %641
  %645 = vrot.lane.b32.xlu0 %v391, 46
  %v646 = vpop.permute.xlu0 %645
  %647 = vrot.lane.b32.xlu0 %v392, 46
  %v648 = vpop.permute.xlu0 %647
  %651 = vrot.lane.b32.xlu0 %v391, 58
  %v652 = vpop.permute.xlu0 %651
  %653 = vrot.lane.b32.xlu0 %v392, 58
  %v654 = vpop.permute.xlu0 %653
  %657 = vrot.lane.b32.xlu0 %v391, 70
  %v658 = vpop.permute.xlu0 %657
  %659 = vrot.lane.b32.xlu0 %v392, 70
  %v660 = vpop.permute.xlu0 %659
  %663 = vrot.lane.b32.xlu0 %v391, 82
  %v664 = vpop.permute.xlu0 %663
  %665 = vrot.lane.b32.xlu0 %v392, 82
  %v666 = vpop.permute.xlu0 %665
  %669 = vrot.lane.b32.xlu0 %v391, 94
  %v670 = vpop.permute.xlu0 %669
  %671 = vrot.lane.b32.xlu0 %v392, 94
  %v672 = vpop.permute.xlu0 %671
  %675 = vrot.lane.b32.xlu0 %v391, 106
  %v676 = vpop.permute.xlu0 %675
  %677 = vrot.lane.b32.xlu0 %v392, 106
  %v678 = vpop.permute.xlu0 %677
  %v681 = vsel %vm91, %v622, %v628
  %v682 = vsel %vm91, %v624, %v630
  %v683 = vsel %vm94, %v681, %v634
  %v684 = vsel %vm94, %v682, %v636
  %v685 = vsel %vm97, %v683, %v640
  %v686 = vsel %vm97, %v684, %v642
  %v687 = vsel %vm100, %v685, %v646
  %v688 = vsel %vm100, %v686, %v648
  %v689 = vsel %vm103, %v687, %v652
  %v690 = vsel %vm103, %v688, %v654
  %v691 = vsel %vm106, %v689, %v658
  %v692 = vsel %vm106, %v690, %v660
  %v693 = vsel %vm109, %v691, %v664
  %v694 = vsel %vm109, %v692, %v666
  %v695 = vsel %vm112, %v693, %v670
  %v696 = vsel %vm112, %v694, %v672
  %v697 = vsel %vm115, %v695, %v676
  %v698 = vsel %vm115, %v696, %v678
  %v699 = vlaneseq
  %v700 = vshrl.u32 %v699, 7
  %v701 = vsub.s32 3, %v700
  %v702 = vrot.slane %v12, %v701
  %v703 = vmul.f32 %v697, %v702
  %v704 = vmul.f32 %v698, %v702
  %v705 = vadd.f32 %v619, %v703
  %v706 = vadd.f32 %v620, %v704
  %v707 = vlaneseq
  %v708 = vshrl.u32 %v707, 7
  %v709 = vsub.s32 6, %v708
  %v710 = vrot.slane %v12, %v709
  %v711 = vmul.f32 %v697, %v710
  %v712 = vmul.f32 %v698, %v710
  %v715 = vrot.slane %v711, 1
  %v716 = vrot.slane %v712, 1
  %v717 = vsel %vm134, %v715, %v716
  %v720 = vadd.f32 %v705, %v717
  %v721 = vadd.f32 %v706, %v716
  %v722 = vlaneseq
  %v723 = vshrl.u32 %v722, 7
  %v724 = vsub.s32 1, %v723
  %v725 = vrot.slane %v13, %v724
  %v726 = vmul.f32 %v697, %v725
  %v727 = vmul.f32 %v698, %v725
  %v730 = vrot.slane %v726, 2
  %v731 = vrot.slane %v727, 2
  %v732 = vsel %vm150, %v730, %v731
  %v735 = vadd.f32 %v720, %v732
  %v736 = vadd.f32 %v721, %v731
  %vm737 = vcmask 982016
  %738 = vst.msk [vmem:[%s2] sm:$0xff] %vm737, %v735
  %vm739 = vcmask 977920
  %740 = vst.msk [vmem:[%s2 + $0x8] sm:$0xf] %vm739, %v736
  %s741 = scalar_lea.vmem %s1, 16
  %v742 = vld [vmem:[%s741] sm:$0xff]
  %v743 = vld [vmem:[%s741 + $0x8] sm:$0xff]
  %746 = vrot.lane.b32.xlu0 %v742, 3
  %v747 = vpop.permute.xlu0 %746
  %748 = vrot.lane.b32.xlu0 %v743, 3
  %v749 = vpop.permute.xlu0 %748
  %752 = vst.msk [vmem:[#allocation2 + $0x3] sm:$0xff] %vm30, %v747
  %753 = vst.msk [vmem:[#allocation2 + $0x13] sm:$0xff] %vm30, %v749
  %v754 = vld [vmem:[#allocation2] sm:$0xff]
  %v755 = vld [vmem:[#allocation2 + $0x8] sm:$0x3f]
  %758 = vrot.lane.b32.xlu0 %v754, 12
  %v759 = vpop.permute.xlu0 %758
  %760 = vrot.lane.b32.xlu0 %v755, 12
  %v761 = vpop.permute.xlu0 %760
  %764 = vrot.lane.b32.xlu0 %v754, 24
  %v765 = vpop.permute.xlu0 %764
  %766 = vrot.lane.b32.xlu0 %v755, 24
  %v767 = vpop.permute.xlu0 %766
  %770 = vrot.lane.b32.xlu0 %v754, 36
  %v771 = vpop.permute.xlu0 %770
  %772 = vrot.lane.b32.xlu0 %v755, 36
  %v773 = vpop.permute.xlu0 %772
  %776 = vrot.lane.b32.xlu0 %v754, 48
  %v777 = vpop.permute.xlu0 %776
  %778 = vrot.lane.b32.xlu0 %v755, 48
  %v779 = vpop.permute.xlu0 %778
  %782 = vrot.lane.b32.xlu0 %v754, 60
  %v783 = vpop.permute.xlu0 %782
  %784 = vrot.lane.b32.xlu0 %v755, 60
  %v785 = vpop.permute.xlu0 %784
  %788 = vrot.lane.b32.xlu0 %v754, 72
  %v789 = vpop.permute.xlu0 %788
  %790 = vrot.lane.b32.xlu0 %v755, 72
  %v791 = vpop.permute.xlu0 %790
  %794 = vrot.lane.b32.xlu0 %v754, 84
  %v795 = vpop.permute.xlu0 %794
  %796 = vrot.lane.b32.xlu0 %v755, 84
  %v797 = vpop.permute.xlu0 %796
  %800 = vrot.lane.b32.xlu0 %v754, 96
  %v801 = vpop.permute.xlu0 %800
  %802 = vrot.lane.b32.xlu0 %v755, 96
  %v803 = vpop.permute.xlu0 %802
  %806 = vrot.lane.b32.xlu0 %v754, 108
  %v807 = vpop.permute.xlu0 %806
  %808 = vrot.lane.b32.xlu0 %v755, 108
  %v809 = vpop.permute.xlu0 %808
  %v812 = vsel %vm91, %v754, %v759
  %v813 = vsel %vm91, %v755, %v761
  %v814 = vsel %vm94, %v812, %v765
  %v815 = vsel %vm94, %v813, %v767
  %v816 = vsel %vm97, %v814, %v771
  %v817 = vsel %vm97, %v815, %v773
  %v818 = vsel %vm100, %v816, %v777
  %v819 = vsel %vm100, %v817, %v779
  %v820 = vsel %vm103, %v818, %v783
  %v821 = vsel %vm103, %v819, %v785
  %v822 = vsel %vm106, %v820, %v789
  %v823 = vsel %vm106, %v821, %v791
  %v824 = vsel %vm109, %v822, %v795
  %v825 = vsel %vm109, %v823, %v797
  %v826 = vsel %vm112, %v824, %v801
  %v827 = vsel %vm112, %v825, %v803
  %v828 = vsel %vm115, %v826, %v807
  %v829 = vsel %vm115, %v827, %v809
  %v830 = vmul.f32 %v828, %v121
  %v831 = vmul.f32 %v829, %v121
  %v832 = vadd.f32 %v830, 0.0
  %v833 = vadd.f32 %v831, 0.0
  %v834 = vmul.f32 %v828, %v129
  %v835 = vmul.f32 %v829, %v129
  %v838 = vrot.slane %v834, 1
  %v839 = vrot.slane %v835, 1
  %v840 = vsel %vm134, %v838, %v839
  %v843 = vadd.f32 %v832, %v840
  %v844 = vadd.f32 %v833, %v839
  %v845 = vmul.f32 %v828, %v145
  %v846 = vmul.f32 %v829, %v145
  %v849 = vrot.slane %v845, 2
  %v850 = vrot.slane %v846, 2
  %v851 = vsel %vm150, %v849, %v850
  %v854 = vadd.f32 %v843, %v851
  %v855 = vadd.f32 %v844, %v850
  %856 = vrot.lane.b32.xlu0 %v754, 127
  %v857 = vpop.permute.xlu0 %856
  %858 = vrot.lane.b32.xlu0 %v755, 127
  %v859 = vpop.permute.xlu0 %858
  %862 = vrot.lane.b32.xlu0 %v754, 11
  %v863 = vpop.permute.xlu0 %862
  %864 = vrot.lane.b32.xlu0 %v755, 11
  %v865 = vpop.permute.xlu0 %864
  %868 = vrot.lane.b32.xlu0 %v754, 23
  %v869 = vpop.permute.xlu0 %868
  %870 = vrot.lane.b32.xlu0 %v755, 23
  %v871 = vpop.permute.xlu0 %870
  %874 = vrot.lane.b32.xlu0 %v754, 35
  %v875 = vpop.permute.xlu0 %874
  %876 = vrot.lane.b32.xlu0 %v755, 35
  %v877 = vpop.permute.xlu0 %876
  %880 = vrot.lane.b32.xlu0 %v754, 47
  %v881 = vpop.permute.xlu0 %880
  %882 = vrot.lane.b32.xlu0 %v755, 47
  %v883 = vpop.permute.xlu0 %882
  %886 = vrot.lane.b32.xlu0 %v754, 59
  %v887 = vpop.permute.xlu0 %886
  %888 = vrot.lane.b32.xlu0 %v755, 59
  %v889 = vpop.permute.xlu0 %888
  %892 = vrot.lane.b32.xlu0 %v754, 71
  %v893 = vpop.permute.xlu0 %892
  %894 = vrot.lane.b32.xlu0 %v755, 71
  %v895 = vpop.permute.xlu0 %894
  %898 = vrot.lane.b32.xlu0 %v754, 83
  %v899 = vpop.permute.xlu0 %898
  %900 = vrot.lane.b32.xlu0 %v755, 83
  %v901 = vpop.permute.xlu0 %900
  %904 = vrot.lane.b32.xlu0 %v754, 95
  %v905 = vpop.permute.xlu0 %904
  %906 = vrot.lane.b32.xlu0 %v755, 95
  %v907 = vpop.permute.xlu0 %906
  %910 = vrot.lane.b32.xlu0 %v754, 107
  %v911 = vpop.permute.xlu0 %910
  %912 = vrot.lane.b32.xlu0 %v755, 107
  %v913 = vpop.permute.xlu0 %912
  %v916 = vsel %vm91, %v857, %v863
  %v917 = vsel %vm91, %v859, %v865
  %v918 = vsel %vm94, %v916, %v869
  %v919 = vsel %vm94, %v917, %v871
  %v920 = vsel %vm97, %v918, %v875
  %v921 = vsel %vm97, %v919, %v877
  %v922 = vsel %vm100, %v920, %v881
  %v923 = vsel %vm100, %v921, %v883
  %v924 = vsel %vm103, %v922, %v887
  %v925 = vsel %vm103, %v923, %v889
  %v926 = vsel %vm106, %v924, %v893
  %v927 = vsel %vm106, %v925, %v895
  %v928 = vsel %vm109, %v926, %v899
  %v929 = vsel %vm109, %v927, %v901
  %v930 = vsel %vm112, %v928, %v905
  %v931 = vsel %vm112, %v929, %v907
  %v932 = vsel %vm115, %v930, %v911
  %v933 = vsel %vm115, %v931, %v913
  %v934 = vmul.f32 %v932, %v239
  %v935 = vmul.f32 %v933, %v239
  %v936 = vadd.f32 %v854, %v934
  %v937 = vadd.f32 %v855, %v935
  %v938 = vmul.f32 %v932, %v247
  %v939 = vmul.f32 %v933, %v247
  %v942 = vrot.slane %v938, 1
  %v943 = vrot.slane %v939, 1
  %v944 = vsel %vm134, %v942, %v943
  %v947 = vadd.f32 %v936, %v944
  %v948 = vadd.f32 %v937, %v943
  %v949 = vmul.f32 %v932, %v262
  %v950 = vmul.f32 %v933, %v262
  %v953 = vrot.slane %v949, 2
  %v954 = vrot.slane %v950, 2
  %v955 = vsel %vm150, %v953, %v954
  %v958 = vadd.f32 %v947, %v955
  %v959 = vadd.f32 %v948, %v954
  %960 = vrot.lane.b32.xlu0 %v754, 126
  %v961 = vpop.permute.xlu0 %960
  %962 = vrot.lane.b32.xlu0 %v755, 126
  %v963 = vpop.permute.xlu0 %962
  %966 = vrot.lane.b32.xlu0 %v754, 10
  %v967 = vpop.permute.xlu0 %966
  %968 = vrot.lane.b32.xlu0 %v755, 10
  %v969 = vpop.permute.xlu0 %968
  %972 = vrot.lane.b32.xlu0 %v754, 22
  %v973 = vpop.permute.xlu0 %972
  %974 = vrot.lane.b32.xlu0 %v755, 22
  %v975 = vpop.permute.xlu0 %974
  %978 = vrot.lane.b32.xlu0 %v754, 34
  %v979 = vpop.permute.xlu0 %978
  %980 = vrot.lane.b32.xlu0 %v755, 34
  %v981 = vpop.permute.xlu0 %980
  %984 = vrot.lane.b32.xlu0 %v754, 46
  %v985 = vpop.permute.xlu0 %984
  %986 = vrot.lane.b32.xlu0 %v755, 46
  %v987 = vpop.permute.xlu0 %986
  %990 = vrot.lane.b32.xlu0 %v754, 58
  %v991 = vpop.permute.xlu0 %990
  %992 = vrot.lane.b32.xlu0 %v755, 58
  %v993 = vpop.permute.xlu0 %992
  %996 = vrot.lane.b32.xlu0 %v754, 70
  %v997 = vpop.permute.xlu0 %996
  %998 = vrot.lane.b32.xlu0 %v755, 70
  %v999 = vpop.permute.xlu0 %998
  %1002 = vrot.lane.b32.xlu0 %v754, 82
  %v1003 = vpop.permute.xlu0 %1002
  %1004 = vrot.lane.b32.xlu0 %v755, 82
  %v1005 = vpop.permute.xlu0 %1004
  %1008 = vrot.lane.b32.xlu0 %v754, 94
  %v1009 = vpop.permute.xlu0 %1008
  %1010 = vrot.lane.b32.xlu0 %v755, 94
  %v1011 = vpop.permute.xlu0 %1010
  %1014 = vrot.lane.b32.xlu0 %v754, 106
  %v1015 = vpop.permute.xlu0 %1014
  %1016 = vrot.lane.b32.xlu0 %v755, 106
  %v1017 = vpop.permute.xlu0 %1016
  %v1020 = vsel %vm91, %v961, %v967
  %v1021 = vsel %vm91, %v963, %v969
  %v1022 = vsel %vm94, %v1020, %v973
  %v1023 = vsel %vm94, %v1021, %v975
  %v1024 = vsel %vm97, %v1022, %v979
  %v1025 = vsel %vm97, %v1023, %v981
  %v1026 = vsel %vm100, %v1024, %v985
  %v1027 = vsel %vm100, %v1025, %v987
  %v1028 = vsel %vm103, %v1026, %v991
  %v1029 = vsel %vm103, %v1027, %v993
  %v1030 = vsel %vm106, %v1028, %v997
  %v1031 = vsel %vm106, %v1029, %v999
  %v1032 = vsel %vm109, %v1030, %v1003
  %v1033 = vsel %vm109, %v1031, %v1005
  %v1034 = vsel %vm112, %v1032, %v1009
  %v1035 = vsel %vm112, %v1033, %v1011
  %v1036 = vsel %vm115, %v1034, %v1015
  %v1037 = vsel %vm115, %v1035, %v1017
  %v1038 = vmul.f32 %v1036, %v355
  %v1039 = vmul.f32 %v1037, %v355
  %v1040 = vadd.f32 %v958, %v1038
  %v1041 = vadd.f32 %v959, %v1039
  %v1042 = vmul.f32 %v1036, %v363
  %v1043 = vmul.f32 %v1037, %v363
  %v1046 = vrot.slane %v1042, 1
  %v1047 = vrot.slane %v1043, 1
  %v1048 = vsel %vm134, %v1046, %v1047
  %v1051 = vadd.f32 %v1040, %v1048
  %v1052 = vadd.f32 %v1041, %v1047
  %v1053 = vmul.f32 %v1036, %v378
  %v1054 = vmul.f32 %v1037, %v378
  %v1057 = vrot.slane %v1053, 2
  %v1058 = vrot.slane %v1054, 2
  %v1059 = vsel %vm150, %v1057, %v1058
  %v1062 = vadd.f32 %v1051, %v1059
  %v1063 = vadd.f32 %v1052, %v1058
  %v1064 = vld [vmem:[%s390] sm:$0xff]
  %v1065 = vld [vmem:[%s390 + $0x8] sm:$0x3f]
  %1068 = vrot.lane.b32.xlu0 %v1064, 12
  %v1069 = vpop.permute.xlu0 %1068
  %1070 = vrot.lane.b32.xlu0 %v1065, 12
  %v1071 = vpop.permute.xlu0 %1070
  %1074 = vrot.lane.b32.xlu0 %v1064, 24
  %v1075 = vpop.permute.xlu0 %1074
  %1076 = vrot.lane.b32.xlu0 %v1065, 24
  %v1077 = vpop.permute.xlu0 %1076
  %1080 = vrot.lane.b32.xlu0 %v1064, 36
  %v1081 = vpop.permute.xlu0 %1080
  %1082 = vrot.lane.b32.xlu0 %v1065, 36
  %v1083 = vpop.permute.xlu0 %1082
  %1086 = vrot.lane.b32.xlu0 %v1064, 48
  %v1087 = vpop.permute.xlu0 %1086
  %1088 = vrot.lane.b32.xlu0 %v1065, 48
  %v1089 = vpop.permute.xlu0 %1088
  %1092 = vrot.lane.b32.xlu0 %v1064, 60
  %v1093 = vpop.permute.xlu0 %1092
  %1094 = vrot.lane.b32.xlu0 %v1065, 60
  %v1095 = vpop.permute.xlu0 %1094
  %1098 = vrot.lane.b32.xlu0 %v1064, 72
  %v1099 = vpop.permute.xlu0 %1098
  %1100 = vrot.lane.b32.xlu0 %v1065, 72
  %v1101 = vpop.permute.xlu0 %1100
  %1104 = vrot.lane.b32.xlu0 %v1064, 84
  %v1105 = vpop.permute.xlu0 %1104
  %1106 = vrot.lane.b32.xlu0 %v1065, 84
  %v1107 = vpop.permute.xlu0 %1106
  %1110 = vrot.lane.b32.xlu0 %v1064, 96
  %v1111 = vpop.permute.xlu0 %1110
  %1112 = vrot.lane.b32.xlu0 %v1065, 96
  %v1113 = vpop.permute.xlu0 %1112
  %1116 = vrot.lane.b32.xlu0 %v1064, 108
  %v1117 = vpop.permute.xlu0 %1116
  %1118 = vrot.lane.b32.xlu0 %v1065, 108
  %v1119 = vpop.permute.xlu0 %1118
  %v1122 = vsel %vm91, %v1064, %v1069
  %v1123 = vsel %vm91, %v1065, %v1071
  %v1124 = vsel %vm94, %v1122, %v1075
  %v1125 = vsel %vm94, %v1123, %v1077
  %v1126 = vsel %vm97, %v1124, %v1081
  %v1127 = vsel %vm97, %v1125, %v1083
  %v1128 = vsel %vm100, %v1126, %v1087
  %v1129 = vsel %vm100, %v1127, %v1089
  %v1130 = vsel %vm103, %v1128, %v1093
  %v1131 = vsel %vm103, %v1129, %v1095
  %v1132 = vsel %vm106, %v1130, %v1099
  %v1133 = vsel %vm106, %v1131, %v1101
  %v1134 = vsel %vm109, %v1132, %v1105
  %v1135 = vsel %vm109, %v1133, %v1107
  %v1136 = vsel %vm112, %v1134, %v1111
  %v1137 = vsel %vm112, %v1135, %v1113
  %v1138 = vsel %vm115, %v1136, %v1117
  %v1139 = vsel %vm115, %v1137, %v1119
  %v1140 = vmul.f32 %v1138, %v470
  %v1141 = vmul.f32 %v1139, %v470
  %v1142 = vadd.f32 %v1062, %v1140
  %v1143 = vadd.f32 %v1063, %v1141
  %v1144 = vmul.f32 %v1138, %v478
  %v1145 = vmul.f32 %v1139, %v478
  %v1148 = vrot.slane %v1144, 1
  %v1149 = vrot.slane %v1145, 1
  %v1150 = vsel %vm134, %v1148, %v1149
  %v1153 = vadd.f32 %v1142, %v1150
  %v1154 = vadd.f32 %v1143, %v1149
  %v1155 = vmul.f32 %v1138, %v493
  %v1156 = vmul.f32 %v1139, %v493
  %v1159 = vrot.slane %v1155, 2
  %v1160 = vrot.slane %v1156, 2
  %v1161 = vsel %vm150, %v1159, %v1160
  %v1164 = vadd.f32 %v1153, %v1161
  %v1165 = vadd.f32 %v1154, %v1160
  %1166 = vrot.lane.b32.xlu0 %v1064, 127
  %v1167 = vpop.permute.xlu0 %1166
  %1168 = vrot.lane.b32.xlu0 %v1065, 127
  %v1169 = vpop.permute.xlu0 %1168
  %1172 = vrot.lane.b32.xlu0 %v1064, 11
  %v1173 = vpop.permute.xlu0 %1172
  %1174 = vrot.lane.b32.xlu0 %v1065, 11
  %v1175 = vpop.permute.xlu0 %1174
  %1178 = vrot.lane.b32.xlu0 %v1064, 23
  %v1179 = vpop.permute.xlu0 %1178
  %1180 = vrot.lane.b32.xlu0 %v1065, 23
  %v1181 = vpop.permute.xlu0 %1180
  %1184 = vrot.lane.b32.xlu0 %v1064, 35
  %v1185 = vpop.permute.xlu0 %1184
  %1186 = vrot.lane.b32.xlu0 %v1065, 35
  %v1187 = vpop.permute.xlu0 %1186
  %1190 = vrot.lane.b32.xlu0 %v1064, 47
  %v1191 = vpop.permute.xlu0 %1190
  %1192 = vrot.lane.b32.xlu0 %v1065, 47
  %v1193 = vpop.permute.xlu0 %1192
  %1196 = vrot.lane.b32.xlu0 %v1064, 59
  %v1197 = vpop.permute.xlu0 %1196
  %1198 = vrot.lane.b32.xlu0 %v1065, 59
  %v1199 = vpop.permute.xlu0 %1198
  %1202 = vrot.lane.b32.xlu0 %v1064, 71
  %v1203 = vpop.permute.xlu0 %1202
  %1204 = vrot.lane.b32.xlu0 %v1065, 71
  %v1205 = vpop.permute.xlu0 %1204
  %1208 = vrot.lane.b32.xlu0 %v1064, 83
  %v1209 = vpop.permute.xlu0 %1208
  %1210 = vrot.lane.b32.xlu0 %v1065, 83
  %v1211 = vpop.permute.xlu0 %1210
  %1214 = vrot.lane.b32.xlu0 %v1064, 95
  %v1215 = vpop.permute.xlu0 %1214
  %1216 = vrot.lane.b32.xlu0 %v1065, 95
  %v1217 = vpop.permute.xlu0 %1216
  %1220 = vrot.lane.b32.xlu0 %v1064, 107
  %v1221 = vpop.permute.xlu0 %1220
  %1222 = vrot.lane.b32.xlu0 %v1065, 107
  %v1223 = vpop.permute.xlu0 %1222
  %v1226 = vsel %vm91, %v1167, %v1173
  %v1227 = vsel %vm91, %v1169, %v1175
  %v1228 = vsel %vm94, %v1226, %v1179
  %v1229 = vsel %vm94, %v1227, %v1181
  %v1230 = vsel %vm97, %v1228, %v1185
  %v1231 = vsel %vm97, %v1229, %v1187
  %v1232 = vsel %vm100, %v1230, %v1191
  %v1233 = vsel %vm100, %v1231, %v1193
  %v1234 = vsel %vm103, %v1232, %v1197
  %v1235 = vsel %vm103, %v1233, %v1199
  %v1236 = vsel %vm106, %v1234, %v1203
  %v1237 = vsel %vm106, %v1235, %v1205
  %v1238 = vsel %vm109, %v1236, %v1209
  %v1239 = vsel %vm109, %v1237, %v1211
  %v1240 = vsel %vm112, %v1238, %v1215
  %v1241 = vsel %vm112, %v1239, %v1217
  %v1242 = vsel %vm115, %v1240, %v1221
  %v1243 = vsel %vm115, %v1241, %v1223
  %v1244 = vmul.f32 %v1242, %v586
  %v1245 = vmul.f32 %v1243, %v586
  %v1246 = vadd.f32 %v1164, %v1244
  %v1247 = vadd.f32 %v1165, %v1245
  %v1248 = vmul.f32 %v1242, %v594
  %v1249 = vmul.f32 %v1243, %v594
  %v1252 = vrot.slane %v1248, 1
  %v1253 = vrot.slane %v1249, 1
  %v1254 = vsel %vm134, %v1252, %v1253
  %v1257 = vadd.f32 %v1246, %v1254
  %v1258 = vadd.f32 %v1247, %v1253
  %v1259 = vmul.f32 %v1242, %v609
  %v1260 = vmul.f32 %v1243, %v609
  %v1263 = vrot.slane %v1259, 2
  %v1264 = vrot.slane %v1260, 2
  %v1265 = vsel %vm150, %v1263, %v1264
  %v1268 = vadd.f32 %v1257, %v1265
  %v1269 = vadd.f32 %v1258, %v1264
  %1270 = vrot.lane.b32.xlu0 %v1064, 126
  %v1271 = vpop.permute.xlu0 %1270
  %1272 = vrot.lane.b32.xlu0 %v1065, 126
  %v1273 = vpop.permute.xlu0 %1272
  %1276 = vrot.lane.b32.xlu0 %v1064, 10
  %v1277 = vpop.permute.xlu0 %1276
  %1278 = vrot.lane.b32.xlu0 %v1065, 10
  %v1279 = vpop.permute.xlu0 %1278
  %1282 = vrot.lane.b32.xlu0 %v1064, 22
  %v1283 = vpop.permute.xlu0 %1282
  %1284 = vrot.lane.b32.xlu0 %v1065, 22
  %v1285 = vpop.permute.xlu0 %1284
  %1288 = vrot.lane.b32.xlu0 %v1064, 34
  %v1289 = vpop.permute.xlu0 %1288
  %1290 = vrot.lane.b32.xlu0 %v1065, 34
  %v1291 = vpop.permute.xlu0 %1290
  %1294 = vrot.lane.b32.xlu0 %v1064, 46
  %v1295 = vpop.permute.xlu0 %1294
  %1296 = vrot.lane.b32.xlu0 %v1065, 46
  %v1297 = vpop.permute.xlu0 %1296
  %1300 = vrot.lane.b32.xlu0 %v1064, 58
  %v1301 = vpop.permute.xlu0 %1300
  %1302 = vrot.lane.b32.xlu0 %v1065, 58
  %v1303 = vpop.permute.xlu0 %1302
  %1306 = vrot.lane.b32.xlu0 %v1064, 70
  %v1307 = vpop.permute.xlu0 %1306
  %1308 = vrot.lane.b32.xlu0 %v1065, 70
  %v1309 = vpop.permute.xlu0 %1308
  %1312 = vrot.lane.b32.xlu0 %v1064, 82
  %v1313 = vpop.permute.xlu0 %1312
  %1314 = vrot.lane.b32.xlu0 %v1065, 82
  %v1315 = vpop.permute.xlu0 %1314
  %1318 = vrot.lane.b32.xlu0 %v1064, 94
  %v1319 = vpop.permute.xlu0 %1318
  %1320 = vrot.lane.b32.xlu0 %v1065, 94
  %v1321 = vpop.permute.xlu0 %1320
  %1324 = vrot.lane.b32.xlu0 %v1064, 106
  %v1325 = vpop.permute.xlu0 %1324
  %1326 = vrot.lane.b32.xlu0 %v1065, 106
  %v1327 = vpop.permute.xlu0 %1326
  %v1330 = vsel %vm91, %v1271, %v1277
  %v1331 = vsel %vm91, %v1273, %v1279
  %v1332 = vsel %vm94, %v1330, %v1283
  %v1333 = vsel %vm94, %v1331, %v1285
  %v1334 = vsel %vm97, %v1332, %v1289
  %v1335 = vsel %vm97, %v1333, %v1291
  %v1336 = vsel %vm100, %v1334, %v1295
  %v1337 = vsel %vm100, %v1335, %v1297
  %v1338 = vsel %vm103, %v1336, %v1301
  %v1339 = vsel %vm103, %v1337, %v1303
  %v1340 = vsel %vm106, %v1338, %v1307
  %v1341 = vsel %vm106, %v1339, %v1309
  %v1342 = vsel %vm109, %v1340, %v1313
  %v1343 = vsel %vm109, %v1341, %v1315
  %v1344 = vsel %vm112, %v1342, %v1319
  %v1345 = vsel %vm112, %v1343, %v1321
  %v1346 = vsel %vm115, %v1344, %v1325
  %v1347 = vsel %vm115, %v1345, %v1327
  %v1348 = vmul.f32 %v1346, %v702
  %v1349 = vmul.f32 %v1347, %v702
  %v1350 = vadd.f32 %v1268, %v1348
  %v1351 = vadd.f32 %v1269, %v1349
  %v1352 = vmul.f32 %v1346, %v710
  %v1353 = vmul.f32 %v1347, %v710
  %v1356 = vrot.slane %v1352, 1
  %v1357 = vrot.slane %v1353, 1
  %v1358 = vsel %vm134, %v1356, %v1357
  %v1361 = vadd.f32 %v1350, %v1358
  %v1362 = vadd.f32 %v1351, %v1357
  %v1363 = vmul.f32 %v1346, %v725
  %v1364 = vmul.f32 %v1347, %v725
  %v1367 = vrot.slane %v1363, 2
  %v1368 = vrot.slane %v1364, 2
  %v1369 = vsel %vm150, %v1367, %v1368
  %v1372 = vadd.f32 %v1361, %v1369
  %v1373 = vadd.f32 %v1362, %v1368
  %s1374 = scalar_lea.vmem %s2, 16
  %1375 = vst.msk [vmem:[%s1374] sm:$0xff] %vm737, %v1372
  %1376 = vst.msk [vmem:[%s1374 + $0x8] sm:$0xf] %vm739, %v1373
  // Predicated region
  $region10: #{conv2d_pad3.1} parent=0 // pred_check
    _
  $region11: #{conv2d_pad3.1} parent=0 // pred_check_branch
    %1378 = sbr.rel (0) target = $region13
  $region12: #{conv2d_pad3.1} parent=0 // pred_region
    _
  $region13: #{conv2d_pad3.1} parent=0 // pred_fallthru
    _
  // Predicated region
  $region14: #{conv2d_pad3.1} parent=0 // pred_check
    _
  $region15: #{conv2d_pad3.1} parent=0 // pred_check_branch
    %1380 = sbr.rel (0) target = $region17
  $region16: #{conv2d_pad3.1} parent=0 // pred_region
    _
  $region17: #{conv2d_pad3.1} parent=0 // pred_fallthru
    _

</llo_original>
